<compile_context>
chip_gen: v5e
topology: v5e:2x2
jax: 0.10.0
libtpu: 0.0.40
codegen_flags: <defaults>
</compile_context>

<pallas_src>
import jax
import jax.numpy as jnp
from jax.experimental import pallas as pl
from jax.experimental.pallas import tpu as pltpu


def _make_kernel(filter_sizes, num_filter):
    n_convs = len(filter_sizes)

    def kernel(*refs):
        # refs = (x, w0_flat, b0, w1_flat, b1, ..., wfc_padded, bfc_padded, out)
        x_ref = refs[0]
        conv_refs = refs[1:1 + 2 * n_convs]
        wfc_ref = refs[1 + 2 * n_convs]          # (F_pad, O_pad)  VMEM, resident
        bfc_ref = refs[2 + 2 * n_convs]          # (1, O_pad)      VMEM, resident
        out_ref = refs[3 + 2 * n_convs]          # (TN, O_pad)     VMEM tile

        x = x_ref[...]                           # (TN, L) f32 batch tile
        tn, L = x.shape
        f_pad = wfc_ref.shape[0]

        pooled_cols = []
        for i, fs in enumerate(filter_sizes):
            w_ref = conv_refs[2 * i]             # (F*fs,) f32 SMEM (scalar reads)
            b_ref = conv_refs[2 * i + 1]         # (F,)    f32 SMEM
            lout = L - fs + 1
            # Hoist the k-shifted input slices once per filter size; reused by
            # every filter below (keeps the intermediate 2-D and sublane-dense).
            taps = [x[:, k:k + lout] for k in range(fs)]
            for f in range(num_filter):
                # Conv1d with in_channels=1: shift-MAC with scalar tap weights.
                s = taps[0] * w_ref[f * fs + 0]
                for k in range(1, fs):
                    s = s + taps[k] * w_ref[f * fs + k]
                # Bias + ReLU hoisted past the max-pool (both monotone -> exact).
                m = jnp.max(s, axis=-1, keepdims=True)          # (TN, 1)
                pooled_cols.append(jnp.maximum(m + b_ref[f], 0.0))

        total_f = len(pooled_cols)
        if f_pad > total_f:
            pooled_cols.append(jnp.zeros((tn, f_pad - total_f), jnp.float32))
        pooled_mat = jnp.concatenate(pooled_cols, axis=-1)      # (TN, F_pad)

        # Fused FC on the MXU: one matmul per batch tile + lane-dense bias add.
        out_ref[...] = (jnp.dot(pooled_mat, wfc_ref[...],
                                preferred_element_type=jnp.float32)
                        + bfc_ref[...])
        # TODO(synk): nn.Dropout is identity at inference (eval mode); not applied.

    return kernel


def textcnn_forward(embedded, conv_ws, conv_bs, fc_w, fc_b,
                    filter_sizes, num_filter, output_dim, block_n=512):
    """embedded: (N, L); conv_ws[i]: (F, fs_i); conv_bs[i]: (F,);
    fc_w: (O, len(fs)*F) (PyTorch layout); fc_b: (O,)."""
    N, L = embedded.shape
    assert L >= max(filter_sizes), "sequence length shorter than largest filter"
    n_convs = len(filter_sizes)
    total_f = n_convs * num_filter
    o_pad = -(-output_dim // 128) * 128          # lane-dense output width
    f_pad = -(-total_f // 128) * 128             # lane-dense MXU contraction dim

    # Batch tile: multiple of 8 sublanes, capped at block_n (matmul-FC keeps the
    # working set tiny, so 512 is safe even on v7x's 64 MiB VMEM).  Force >=2
    # tiles whenever possible so both v7x TensorCores get work.
    tn = max(8, (min(block_n, N) // 8) * 8)
    if -(-N // tn) < 2 and N > 8:
        tn = max(8, ((-(-N // 2) + 7) // 8) * 8)
    n_pad = -(-N // tn) * tn

    x = embedded.astype(jnp.float32)
    if n_pad != N:
        x = jnp.pad(x, ((0, n_pad - N), (0, 0)))

    wfc = jnp.pad(fc_w.T.astype(jnp.float32),                    # (total_f, O)
                  ((0, f_pad - total_f), (0, o_pad - output_dim)))  # (F_pad, O_pad)
    bfc = jnp.pad(fc_b.astype(jnp.float32),
                  (0, o_pad - output_dim)).reshape(1, o_pad)

    inputs = [x]
    in_specs = [pl.BlockSpec((tn, L), lambda i: (i, 0))]
    for w, b in zip(conv_ws, conv_bs):
        # Flattened 1-D SMEM weights: avoids the 2-D [ceil(F/8)*8, 128] padding.
        inputs.append(w.astype(jnp.float32).reshape(-1))         # (F*fs,)
        in_specs.append(pl.BlockSpec(memory_space=pltpu.MemorySpace.SMEM))
        inputs.append(b.astype(jnp.float32))                     # (F,)
        in_specs.append(pl.BlockSpec(memory_space=pltpu.MemorySpace.SMEM))
    inputs += [wfc, bfc]
    in_specs += [pl.BlockSpec(memory_space=pltpu.MemorySpace.VMEM),
                 pl.BlockSpec(memory_space=pltpu.MemorySpace.VMEM)]

    kernel = _make_kernel(tuple(filter_sizes), num_filter)
    out = pl.pallas_call(
        kernel,
        out_shape=jax.ShapeDtypeStruct((n_pad, o_pad), jnp.float32),
        grid=(n_pad // tn,),
        in_specs=in_specs,
        out_specs=pl.BlockSpec((tn, o_pad), lambda i: (i, 0)),
        compiler_params=pltpu.CompilerParams(
            dimension_semantics=("parallel",)),
    )(*inputs)
    return out[:N, :output_dim]


def textcnn_reference(embedded, conv_ws, conv_bs, fc_w, fc_b):
    """Pure-JAX reference matching the PyTorch forward (eval mode)."""
    pooled = []
    for w, b in zip(conv_ws, conv_bs):
        F_, fs = w.shape
        Lout = embedded.shape[1] - fs + 1
        windows = jnp.stack([embedded[:, k:k + Lout] for k in range(fs)], axis=-1)
        s = jnp.einsum("ntk,fk->nft", windows, w) + b[None, :, None]
        s = jnp.maximum(s, 0.0)
        pooled.append(jnp.max(s, axis=-1))
    cat = jnp.concatenate(pooled, axis=1)
    return cat @ fc_w.T + fc_b[None, :]


if __name__ == "__main__":
    # Small, module-consistent shapes; batch=16 -> two (8, L) grid tiles.
    batch = 16
    embedding_dim = 32          # L: the Conv1d length axis
    num_filter = 8
    filter_sizes = (3, 4, 5)
    output_dim = 4

    key = jax.random.PRNGKey(0)
    keys = jax.random.split(key, 2 * len(filter_sizes) + 3)

    embedded = jax.random.normal(keys[0], (batch, embedding_dim), jnp.float32)

    conv_ws, conv_bs = [], []
    for i, fs in enumerate(filter_sizes):
        conv_ws.append(0.3 * jax.random.normal(keys[1 + 2 * i],
                                               (num_filter, fs), jnp.float32))
        conv_bs.append(0.1 * jax.random.normal(keys[2 + 2 * i],
                                               (num_filter,), jnp.float32))
    fc_w = 0.2 * jax.random.normal(keys[-2],
                                   (output_dim, len(filter_sizes) * num_filter),
                                   jnp.float32)
    fc_b = 0.1 * jax.random.normal(keys[-1], (output_dim,), jnp.float32)

    out = textcnn_forward(embedded, conv_ws, conv_bs, fc_w, fc_b,
                          filter_sizes, num_filter, output_dim)
    out = jax.block_until_ready(out)

    ref = textcnn_reference(embedded, conv_ws, conv_bs, fc_w, fc_b)
    assert out.shape == (batch, output_dim)
    assert jnp.allclose(out, ref, rtol=1e-5, atol=1e-5), "mismatch vs JAX reference"

    print("KERNEL_OK")
</pallas_src>

<mosaic_0001>
module attributes {stable_mosaic.version = 11 : i64} {
  func.func @kernel(%arg0: i32, %arg1: memref<8x32xf32, #tpu.memory_space<vmem>>, %arg2: memref<24xf32, #tpu.memory_space<smem>>, %arg3: memref<8xf32, #tpu.memory_space<smem>>, %arg4: memref<32xf32, #tpu.memory_space<smem>>, %arg5: memref<8xf32, #tpu.memory_space<smem>>, %arg6: memref<40xf32, #tpu.memory_space<smem>>, %arg7: memref<8xf32, #tpu.memory_space<smem>>, %arg8: memref<128x128xf32, #tpu.memory_space<vmem>>, %arg9: memref<1x128xf32, #tpu.memory_space<vmem>>, %arg10: memref<8x128xf32, #tpu.memory_space<vmem>>) attributes {dimension_semantics = [#tpu.dimension_semantics<parallel>], iteration_bounds = array<i64: 2>, scalar_prefetch = 0 : i64, scratch_operands = 0 : i64, tpu.core_type = #tpu.core_type<tc>, window_params = [{transform_indices = @transform_0, window_bounds = array<i64: 8, 32>}, {transform_indices = @transform_1, window_bounds = array<i64: 24>}, {transform_indices = @transform_2, window_bounds = array<i64: 8>}, {transform_indices = @transform_3, window_bounds = array<i64: 32>}, {transform_indices = @transform_4, window_bounds = array<i64: 8>}, {transform_indices = @transform_5, window_bounds = array<i64: 40>}, {transform_indices = @transform_6, window_bounds = array<i64: 8>}, {pipeline_mode = #tpu.pipeline_mode<synchronous>, transform_indices = @transform_7, window_bounds = array<i64: 128, 128>}, {pipeline_mode = #tpu.pipeline_mode<synchronous>, transform_indices = @transform_8, window_bounds = array<i64: 1, 128>}, {transform_indices = @transform_9, window_bounds = array<i64: 8, 128>}]} {
    %c0 = arith.constant 0 : index
    %c0_0 = arith.constant 0 : index
    %0 = vector.load %arg1[%c0, %c0_0] : memref<8x32xf32, #tpu.memory_space<vmem>>, vector<8x32xf32>
    %1 = vector.extract_strided_slice %0 {offsets = [0, 0], sizes = [8, 30], strides = [1, 1]} : vector<8x32xf32> to vector<8x30xf32>
    %2 = vector.extract_strided_slice %0 {offsets = [0, 1], sizes = [8, 30], strides = [1, 1]} : vector<8x32xf32> to vector<8x30xf32>
    %3 = vector.extract_strided_slice %0 {offsets = [0, 2], sizes = [8, 30], strides = [1, 1]} : vector<8x32xf32> to vector<8x30xf32>
    %c0_1 = arith.constant 0 : index
    %4 = memref.load %arg2[%c0_1] : memref<24xf32, #tpu.memory_space<smem>>
    %5 = vector.broadcast %4 : f32 to vector<8x30xf32>
    %6 = arith.mulf %1, %5 : vector<8x30xf32>
    %c1 = arith.constant 1 : index
    %7 = memref.load %arg2[%c1] : memref<24xf32, #tpu.memory_space<smem>>
    %8 = vector.broadcast %7 : f32 to vector<8x30xf32>
    %9 = arith.mulf %2, %8 : vector<8x30xf32>
    %10 = arith.addf %6, %9 : vector<8x30xf32>
    %c2 = arith.constant 2 : index
    %11 = memref.load %arg2[%c2] : memref<24xf32, #tpu.memory_space<smem>>
    %12 = vector.broadcast %11 : f32 to vector<8x30xf32>
    %13 = arith.mulf %3, %12 : vector<8x30xf32>
    %14 = arith.addf %10, %13 : vector<8x30xf32>
    %cst = arith.constant dense<0xFF800000> : vector<8xf32>
    %15 = vector.multi_reduction <maximumf>, %14, %cst [1] : vector<8x30xf32> to vector<8xf32>
    %16 = vector.shape_cast %15 : vector<8xf32> to vector<8x1xf32>
    %c0_2 = arith.constant 0 : index
    %17 = memref.load %arg3[%c0_2] : memref<8xf32, #tpu.memory_space<smem>>
    %18 = vector.broadcast %17 : f32 to vector<8x1xf32>
    %19 = arith.addf %16, %18 : vector<8x1xf32>
    %cst_3 = arith.constant 0.000000e+00 : f32
    %20 = vector.broadcast %cst_3 : f32 to vector<8x1xf32>
    %21 = arith.maximumf %19, %20 : vector<8x1xf32>
    %c3 = arith.constant 3 : index
    %22 = memref.load %arg2[%c3] : memref<24xf32, #tpu.memory_space<smem>>
    %23 = vector.broadcast %22 : f32 to vector<8x30xf32>
    %24 = arith.mulf %1, %23 : vector<8x30xf32>
    %c4 = arith.constant 4 : index
    %25 = memref.load %arg2[%c4] : memref<24xf32, #tpu.memory_space<smem>>
    %26 = vector.broadcast %25 : f32 to vector<8x30xf32>
    %27 = arith.mulf %2, %26 : vector<8x30xf32>
    %28 = arith.addf %24, %27 : vector<8x30xf32>
    %c5 = arith.constant 5 : index
    %29 = memref.load %arg2[%c5] : memref<24xf32, #tpu.memory_space<smem>>
    %30 = vector.broadcast %29 : f32 to vector<8x30xf32>
    %31 = arith.mulf %3, %30 : vector<8x30xf32>
    %32 = arith.addf %28, %31 : vector<8x30xf32>
    %cst_4 = arith.constant dense<0xFF800000> : vector<8xf32>
    %33 = vector.multi_reduction <maximumf>, %32, %cst_4 [1] : vector<8x30xf32> to vector<8xf32>
    %34 = vector.shape_cast %33 : vector<8xf32> to vector<8x1xf32>
    %c1_5 = arith.constant 1 : index
    %35 = memref.load %arg3[%c1_5] : memref<8xf32, #tpu.memory_space<smem>>
    %36 = vector.broadcast %35 : f32 to vector<8x1xf32>
    %37 = arith.addf %34, %36 : vector<8x1xf32>
    %cst_6 = arith.constant 0.000000e+00 : f32
    %38 = vector.broadcast %cst_6 : f32 to vector<8x1xf32>
    %39 = arith.maximumf %37, %38 : vector<8x1xf32>
    %c6 = arith.constant 6 : index
    %40 = memref.load %arg2[%c6] : memref<24xf32, #tpu.memory_space<smem>>
    %41 = vector.broadcast %40 : f32 to vector<8x30xf32>
    %42 = arith.mulf %1, %41 : vector<8x30xf32>
    %c7 = arith.constant 7 : index
    %43 = memref.load %arg2[%c7] : memref<24xf32, #tpu.memory_space<smem>>
    %44 = vector.broadcast %43 : f32 to vector<8x30xf32>
    %45 = arith.mulf %2, %44 : vector<8x30xf32>
    %46 = arith.addf %42, %45 : vector<8x30xf32>
    %c8 = arith.constant 8 : index
    %47 = memref.load %arg2[%c8] : memref<24xf32, #tpu.memory_space<smem>>
    %48 = vector.broadcast %47 : f32 to vector<8x30xf32>
    %49 = arith.mulf %3, %48 : vector<8x30xf32>
    %50 = arith.addf %46, %49 : vector<8x30xf32>
    %cst_7 = arith.constant dense<0xFF800000> : vector<8xf32>
    %51 = vector.multi_reduction <maximumf>, %50, %cst_7 [1] : vector<8x30xf32> to vector<8xf32>
    %52 = vector.shape_cast %51 : vector<8xf32> to vector<8x1xf32>
    %c2_8 = arith.constant 2 : index
    %53 = memref.load %arg3[%c2_8] : memref<8xf32, #tpu.memory_space<smem>>
    %54 = vector.broadcast %53 : f32 to vector<8x1xf32>
    %55 = arith.addf %52, %54 : vector<8x1xf32>
    %cst_9 = arith.constant 0.000000e+00 : f32
    %56 = vector.broadcast %cst_9 : f32 to vector<8x1xf32>
    %57 = arith.maximumf %55, %56 : vector<8x1xf32>
    %c9 = arith.constant 9 : index
    %58 = memref.load %arg2[%c9] : memref<24xf32, #tpu.memory_space<smem>>
    %59 = vector.broadcast %58 : f32 to vector<8x30xf32>
    %60 = arith.mulf %1, %59 : vector<8x30xf32>
    %c10 = arith.constant 10 : index
    %61 = memref.load %arg2[%c10] : memref<24xf32, #tpu.memory_space<smem>>
    %62 = vector.broadcast %61 : f32 to vector<8x30xf32>
    %63 = arith.mulf %2, %62 : vector<8x30xf32>
    %64 = arith.addf %60, %63 : vector<8x30xf32>
    %c11 = arith.constant 11 : index
    %65 = memref.load %arg2[%c11] : memref<24xf32, #tpu.memory_space<smem>>
    %66 = vector.broadcast %65 : f32 to vector<8x30xf32>
    %67 = arith.mulf %3, %66 : vector<8x30xf32>
    %68 = arith.addf %64, %67 : vector<8x30xf32>
    %cst_10 = arith.constant dense<0xFF800000> : vector<8xf32>
    %69 = vector.multi_reduction <maximumf>, %68, %cst_10 [1] : vector<8x30xf32> to vector<8xf32>
    %70 = vector.shape_cast %69 : vector<8xf32> to vector<8x1xf32>
    %c3_11 = arith.constant 3 : index
    %71 = memref.load %arg3[%c3_11] : memref<8xf32, #tpu.memory_space<smem>>
    %72 = vector.broadcast %71 : f32 to vector<8x1xf32>
    %73 = arith.addf %70, %72 : vector<8x1xf32>
    %cst_12 = arith.constant 0.000000e+00 : f32
    %74 = vector.broadcast %cst_12 : f32 to vector<8x1xf32>
    %75 = arith.maximumf %73, %74 : vector<8x1xf32>
    %c12 = arith.constant 12 : index
    %76 = memref.load %arg2[%c12] : memref<24xf32, #tpu.memory_space<smem>>
    %77 = vector.broadcast %76 : f32 to vector<8x30xf32>
    %78 = arith.mulf %1, %77 : vector<8x30xf32>
    %c13 = arith.constant 13 : index
    %79 = memref.load %arg2[%c13] : memref<24xf32, #tpu.memory_space<smem>>
    %80 = vector.broadcast %79 : f32 to vector<8x30xf32>
    %81 = arith.mulf %2, %80 : vector<8x30xf32>
    %82 = arith.addf %78, %81 : vector<8x30xf32>
    %c14 = arith.constant 14 : index
    %83 = memref.load %arg2[%c14] : memref<24xf32, #tpu.memory_space<smem>>
    %84 = vector.broadcast %83 : f32 to vector<8x30xf32>
    %85 = arith.mulf %3, %84 : vector<8x30xf32>
    %86 = arith.addf %82, %85 : vector<8x30xf32>
    %cst_13 = arith.constant dense<0xFF800000> : vector<8xf32>
    %87 = vector.multi_reduction <maximumf>, %86, %cst_13 [1] : vector<8x30xf32> to vector<8xf32>
    %88 = vector.shape_cast %87 : vector<8xf32> to vector<8x1xf32>
    %c4_14 = arith.constant 4 : index
    %89 = memref.load %arg3[%c4_14] : memref<8xf32, #tpu.memory_space<smem>>
    %90 = vector.broadcast %89 : f32 to vector<8x1xf32>
    %91 = arith.addf %88, %90 : vector<8x1xf32>
    %cst_15 = arith.constant 0.000000e+00 : f32
    %92 = vector.broadcast %cst_15 : f32 to vector<8x1xf32>
    %93 = arith.maximumf %91, %92 : vector<8x1xf32>
    %c15 = arith.constant 15 : index
    %94 = memref.load %arg2[%c15] : memref<24xf32, #tpu.memory_space<smem>>
    %95 = vector.broadcast %94 : f32 to vector<8x30xf32>
    %96 = arith.mulf %1, %95 : vector<8x30xf32>
    %c16 = arith.constant 16 : index
    %97 = memref.load %arg2[%c16] : memref<24xf32, #tpu.memory_space<smem>>
    %98 = vector.broadcast %97 : f32 to vector<8x30xf32>
    %99 = arith.mulf %2, %98 : vector<8x30xf32>
    %100 = arith.addf %96, %99 : vector<8x30xf32>
    %c17 = arith.constant 17 : index
    %101 = memref.load %arg2[%c17] : memref<24xf32, #tpu.memory_space<smem>>
    %102 = vector.broadcast %101 : f32 to vector<8x30xf32>
    %103 = arith.mulf %3, %102 : vector<8x30xf32>
    %104 = arith.addf %100, %103 : vector<8x30xf32>
    %cst_16 = arith.constant dense<0xFF800000> : vector<8xf32>
    %105 = vector.multi_reduction <maximumf>, %104, %cst_16 [1] : vector<8x30xf32> to vector<8xf32>
    %106 = vector.shape_cast %105 : vector<8xf32> to vector<8x1xf32>
    %c5_17 = arith.constant 5 : index
    %107 = memref.load %arg3[%c5_17] : memref<8xf32, #tpu.memory_space<smem>>
    %108 = vector.broadcast %107 : f32 to vector<8x1xf32>
    %109 = arith.addf %106, %108 : vector<8x1xf32>
    %cst_18 = arith.constant 0.000000e+00 : f32
    %110 = vector.broadcast %cst_18 : f32 to vector<8x1xf32>
    %111 = arith.maximumf %109, %110 : vector<8x1xf32>
    %c18 = arith.constant 18 : index
    %112 = memref.load %arg2[%c18] : memref<24xf32, #tpu.memory_space<smem>>
    %113 = vector.broadcast %112 : f32 to vector<8x30xf32>
    %114 = arith.mulf %1, %113 : vector<8x30xf32>
    %c19 = arith.constant 19 : index
    %115 = memref.load %arg2[%c19] : memref<24xf32, #tpu.memory_space<smem>>
    %116 = vector.broadcast %115 : f32 to vector<8x30xf32>
    %117 = arith.mulf %2, %116 : vector<8x30xf32>
    %118 = arith.addf %114, %117 : vector<8x30xf32>
    %c20 = arith.constant 20 : index
    %119 = memref.load %arg2[%c20] : memref<24xf32, #tpu.memory_space<smem>>
    %120 = vector.broadcast %119 : f32 to vector<8x30xf32>
    %121 = arith.mulf %3, %120 : vector<8x30xf32>
    %122 = arith.addf %118, %121 : vector<8x30xf32>
    %cst_19 = arith.constant dense<0xFF800000> : vector<8xf32>
    %123 = vector.multi_reduction <maximumf>, %122, %cst_19 [1] : vector<8x30xf32> to vector<8xf32>
    %124 = vector.shape_cast %123 : vector<8xf32> to vector<8x1xf32>
    %c6_20 = arith.constant 6 : index
    %125 = memref.load %arg3[%c6_20] : memref<8xf32, #tpu.memory_space<smem>>
    %126 = vector.broadcast %125 : f32 to vector<8x1xf32>
    %127 = arith.addf %124, %126 : vector<8x1xf32>
    %cst_21 = arith.constant 0.000000e+00 : f32
    %128 = vector.broadcast %cst_21 : f32 to vector<8x1xf32>
    %129 = arith.maximumf %127, %128 : vector<8x1xf32>
    %c21 = arith.constant 21 : index
    %130 = memref.load %arg2[%c21] : memref<24xf32, #tpu.memory_space<smem>>
    %131 = vector.broadcast %130 : f32 to vector<8x30xf32>
    %132 = arith.mulf %1, %131 : vector<8x30xf32>
    %c22 = arith.constant 22 : index
    %133 = memref.load %arg2[%c22] : memref<24xf32, #tpu.memory_space<smem>>
    %134 = vector.broadcast %133 : f32 to vector<8x30xf32>
    %135 = arith.mulf %2, %134 : vector<8x30xf32>
    %136 = arith.addf %132, %135 : vector<8x30xf32>
    %c23 = arith.constant 23 : index
    %137 = memref.load %arg2[%c23] : memref<24xf32, #tpu.memory_space<smem>>
    %138 = vector.broadcast %137 : f32 to vector<8x30xf32>
    %139 = arith.mulf %3, %138 : vector<8x30xf32>
    %140 = arith.addf %136, %139 : vector<8x30xf32>
    %cst_22 = arith.constant dense<0xFF800000> : vector<8xf32>
    %141 = vector.multi_reduction <maximumf>, %140, %cst_22 [1] : vector<8x30xf32> to vector<8xf32>
    %142 = vector.shape_cast %141 : vector<8xf32> to vector<8x1xf32>
    %c7_23 = arith.constant 7 : index
    %143 = memref.load %arg3[%c7_23] : memref<8xf32, #tpu.memory_space<smem>>
    %144 = vector.broadcast %143 : f32 to vector<8x1xf32>
    %145 = arith.addf %142, %144 : vector<8x1xf32>
    %cst_24 = arith.constant 0.000000e+00 : f32
    %146 = vector.broadcast %cst_24 : f32 to vector<8x1xf32>
    %147 = arith.maximumf %145, %146 : vector<8x1xf32>
    %148 = vector.extract_strided_slice %0 {offsets = [0, 0], sizes = [8, 29], strides = [1, 1]} : vector<8x32xf32> to vector<8x29xf32>
    %149 = vector.extract_strided_slice %0 {offsets = [0, 1], sizes = [8, 29], strides = [1, 1]} : vector<8x32xf32> to vector<8x29xf32>
    %150 = vector.extract_strided_slice %0 {offsets = [0, 2], sizes = [8, 29], strides = [1, 1]} : vector<8x32xf32> to vector<8x29xf32>
    %151 = vector.extract_strided_slice %0 {offsets = [0, 3], sizes = [8, 29], strides = [1, 1]} : vector<8x32xf32> to vector<8x29xf32>
    %c0_25 = arith.constant 0 : index
    %152 = memref.load %arg4[%c0_25] : memref<32xf32, #tpu.memory_space<smem>>
    %153 = vector.broadcast %152 : f32 to vector<8x29xf32>
    %154 = arith.mulf %148, %153 : vector<8x29xf32>
    %c1_26 = arith.constant 1 : index
    %155 = memref.load %arg4[%c1_26] : memref<32xf32, #tpu.memory_space<smem>>
    %156 = vector.broadcast %155 : f32 to vector<8x29xf32>
    %157 = arith.mulf %149, %156 : vector<8x29xf32>
    %158 = arith.addf %154, %157 : vector<8x29xf32>
    %c2_27 = arith.constant 2 : index
    %159 = memref.load %arg4[%c2_27] : memref<32xf32, #tpu.memory_space<smem>>
    %160 = vector.broadcast %159 : f32 to vector<8x29xf32>
    %161 = arith.mulf %150, %160 : vector<8x29xf32>
    %162 = arith.addf %158, %161 : vector<8x29xf32>
    %c3_28 = arith.constant 3 : index
    %163 = memref.load %arg4[%c3_28] : memref<32xf32, #tpu.memory_space<smem>>
    %164 = vector.broadcast %163 : f32 to vector<8x29xf32>
    %165 = arith.mulf %151, %164 : vector<8x29xf32>
    %166 = arith.addf %162, %165 : vector<8x29xf32>
    %cst_29 = arith.constant dense<0xFF800000> : vector<8xf32>
    %167 = vector.multi_reduction <maximumf>, %166, %cst_29 [1] : vector<8x29xf32> to vector<8xf32>
    %168 = vector.shape_cast %167 : vector<8xf32> to vector<8x1xf32>
    %c0_30 = arith.constant 0 : index
    %169 = memref.load %arg5[%c0_30] : memref<8xf32, #tpu.memory_space<smem>>
    %170 = vector.broadcast %169 : f32 to vector<8x1xf32>
    %171 = arith.addf %168, %170 : vector<8x1xf32>
    %cst_31 = arith.constant 0.000000e+00 : f32
    %172 = vector.broadcast %cst_31 : f32 to vector<8x1xf32>
    %173 = arith.maximumf %171, %172 : vector<8x1xf32>
    %c4_32 = arith.constant 4 : index
    %174 = memref.load %arg4[%c4_32] : memref<32xf32, #tpu.memory_space<smem>>
    %175 = vector.broadcast %174 : f32 to vector<8x29xf32>
    %176 = arith.mulf %148, %175 : vector<8x29xf32>
    %c5_33 = arith.constant 5 : index
    %177 = memref.load %arg4[%c5_33] : memref<32xf32, #tpu.memory_space<smem>>
    %178 = vector.broadcast %177 : f32 to vector<8x29xf32>
    %179 = arith.mulf %149, %178 : vector<8x29xf32>
    %180 = arith.addf %176, %179 : vector<8x29xf32>
    %c6_34 = arith.constant 6 : index
    %181 = memref.load %arg4[%c6_34] : memref<32xf32, #tpu.memory_space<smem>>
    %182 = vector.broadcast %181 : f32 to vector<8x29xf32>
    %183 = arith.mulf %150, %182 : vector<8x29xf32>
    %184 = arith.addf %180, %183 : vector<8x29xf32>
    %c7_35 = arith.constant 7 : index
    %185 = memref.load %arg4[%c7_35] : memref<32xf32, #tpu.memory_space<smem>>
    %186 = vector.broadcast %185 : f32 to vector<8x29xf32>
    %187 = arith.mulf %151, %186 : vector<8x29xf32>
    %188 = arith.addf %184, %187 : vector<8x29xf32>
    %cst_36 = arith.constant dense<0xFF800000> : vector<8xf32>
    %189 = vector.multi_reduction <maximumf>, %188, %cst_36 [1] : vector<8x29xf32> to vector<8xf32>
    %190 = vector.shape_cast %189 : vector<8xf32> to vector<8x1xf32>
    %c1_37 = arith.constant 1 : index
    %191 = memref.load %arg5[%c1_37] : memref<8xf32, #tpu.memory_space<smem>>
    %192 = vector.broadcast %191 : f32 to vector<8x1xf32>
    %193 = arith.addf %190, %192 : vector<8x1xf32>
    %cst_38 = arith.constant 0.000000e+00 : f32
    %194 = vector.broadcast %cst_38 : f32 to vector<8x1xf32>
    %195 = arith.maximumf %193, %194 : vector<8x1xf32>
    %c8_39 = arith.constant 8 : index
    %196 = memref.load %arg4[%c8_39] : memref<32xf32, #tpu.memory_space<smem>>
    %197 = vector.broadcast %196 : f32 to vector<8x29xf32>
    %198 = arith.mulf %148, %197 : vector<8x29xf32>
    %c9_40 = arith.constant 9 : index
    %199 = memref.load %arg4[%c9_40] : memref<32xf32, #tpu.memory_space<smem>>
    %200 = vector.broadcast %199 : f32 to vector<8x29xf32>
    %201 = arith.mulf %149, %200 : vector<8x29xf32>
    %202 = arith.addf %198, %201 : vector<8x29xf32>
    %c10_41 = arith.constant 10 : index
    %203 = memref.load %arg4[%c10_41] : memref<32xf32, #tpu.memory_space<smem>>
    %204 = vector.broadcast %203 : f32 to vector<8x29xf32>
    %205 = arith.mulf %150, %204 : vector<8x29xf32>
    %206 = arith.addf %202, %205 : vector<8x29xf32>
    %c11_42 = arith.constant 11 : index
    %207 = memref.load %arg4[%c11_42] : memref<32xf32, #tpu.memory_space<smem>>
    %208 = vector.broadcast %207 : f32 to vector<8x29xf32>
    %209 = arith.mulf %151, %208 : vector<8x29xf32>
    %210 = arith.addf %206, %209 : vector<8x29xf32>
    %cst_43 = arith.constant dense<0xFF800000> : vector<8xf32>
    %211 = vector.multi_reduction <maximumf>, %210, %cst_43 [1] : vector<8x29xf32> to vector<8xf32>
    %212 = vector.shape_cast %211 : vector<8xf32> to vector<8x1xf32>
    %c2_44 = arith.constant 2 : index
    %213 = memref.load %arg5[%c2_44] : memref<8xf32, #tpu.memory_space<smem>>
    %214 = vector.broadcast %213 : f32 to vector<8x1xf32>
    %215 = arith.addf %212, %214 : vector<8x1xf32>
    %cst_45 = arith.constant 0.000000e+00 : f32
    %216 = vector.broadcast %cst_45 : f32 to vector<8x1xf32>
    %217 = arith.maximumf %215, %216 : vector<8x1xf32>
    %c12_46 = arith.constant 12 : index
    %218 = memref.load %arg4[%c12_46] : memref<32xf32, #tpu.memory_space<smem>>
    %219 = vector.broadcast %218 : f32 to vector<8x29xf32>
    %220 = arith.mulf %148, %219 : vector<8x29xf32>
    %c13_47 = arith.constant 13 : index
    %221 = memref.load %arg4[%c13_47] : memref<32xf32, #tpu.memory_space<smem>>
    %222 = vector.broadcast %221 : f32 to vector<8x29xf32>
    %223 = arith.mulf %149, %222 : vector<8x29xf32>
    %224 = arith.addf %220, %223 : vector<8x29xf32>
    %c14_48 = arith.constant 14 : index
    %225 = memref.load %arg4[%c14_48] : memref<32xf32, #tpu.memory_space<smem>>
    %226 = vector.broadcast %225 : f32 to vector<8x29xf32>
    %227 = arith.mulf %150, %226 : vector<8x29xf32>
    %228 = arith.addf %224, %227 : vector<8x29xf32>
    %c15_49 = arith.constant 15 : index
    %229 = memref.load %arg4[%c15_49] : memref<32xf32, #tpu.memory_space<smem>>
    %230 = vector.broadcast %229 : f32 to vector<8x29xf32>
    %231 = arith.mulf %151, %230 : vector<8x29xf32>
    %232 = arith.addf %228, %231 : vector<8x29xf32>
    %cst_50 = arith.constant dense<0xFF800000> : vector<8xf32>
    %233 = vector.multi_reduction <maximumf>, %232, %cst_50 [1] : vector<8x29xf32> to vector<8xf32>
    %234 = vector.shape_cast %233 : vector<8xf32> to vector<8x1xf32>
    %c3_51 = arith.constant 3 : index
    %235 = memref.load %arg5[%c3_51] : memref<8xf32, #tpu.memory_space<smem>>
    %236 = vector.broadcast %235 : f32 to vector<8x1xf32>
    %237 = arith.addf %234, %236 : vector<8x1xf32>
    %cst_52 = arith.constant 0.000000e+00 : f32
    %238 = vector.broadcast %cst_52 : f32 to vector<8x1xf32>
    %239 = arith.maximumf %237, %238 : vector<8x1xf32>
    %c16_53 = arith.constant 16 : index
    %240 = memref.load %arg4[%c16_53] : memref<32xf32, #tpu.memory_space<smem>>
    %241 = vector.broadcast %240 : f32 to vector<8x29xf32>
    %242 = arith.mulf %148, %241 : vector<8x29xf32>
    %c17_54 = arith.constant 17 : index
    %243 = memref.load %arg4[%c17_54] : memref<32xf32, #tpu.memory_space<smem>>
    %244 = vector.broadcast %243 : f32 to vector<8x29xf32>
    %245 = arith.mulf %149, %244 : vector<8x29xf32>
    %246 = arith.addf %242, %245 : vector<8x29xf32>
    %c18_55 = arith.constant 18 : index
    %247 = memref.load %arg4[%c18_55] : memref<32xf32, #tpu.memory_space<smem>>
    %248 = vector.broadcast %247 : f32 to vector<8x29xf32>
    %249 = arith.mulf %150, %248 : vector<8x29xf32>
    %250 = arith.addf %246, %249 : vector<8x29xf32>
    %c19_56 = arith.constant 19 : index
    %251 = memref.load %arg4[%c19_56] : memref<32xf32, #tpu.memory_space<smem>>
    %252 = vector.broadcast %251 : f32 to vector<8x29xf32>
    %253 = arith.mulf %151, %252 : vector<8x29xf32>
    %254 = arith.addf %250, %253 : vector<8x29xf32>
    %cst_57 = arith.constant dense<0xFF800000> : vector<8xf32>
    %255 = vector.multi_reduction <maximumf>, %254, %cst_57 [1] : vector<8x29xf32> to vector<8xf32>
    %256 = vector.shape_cast %255 : vector<8xf32> to vector<8x1xf32>
    %c4_58 = arith.constant 4 : index
    %257 = memref.load %arg5[%c4_58] : memref<8xf32, #tpu.memory_space<smem>>
    %258 = vector.broadcast %257 : f32 to vector<8x1xf32>
    %259 = arith.addf %256, %258 : vector<8x1xf32>
    %cst_59 = arith.constant 0.000000e+00 : f32
    %260 = vector.broadcast %cst_59 : f32 to vector<8x1xf32>
    %261 = arith.maximumf %259, %260 : vector<8x1xf32>
    %c20_60 = arith.constant 20 : index
    %262 = memref.load %arg4[%c20_60] : memref<32xf32, #tpu.memory_space<smem>>
    %263 = vector.broadcast %262 : f32 to vector<8x29xf32>
    %264 = arith.mulf %148, %263 : vector<8x29xf32>
    %c21_61 = arith.constant 21 : index
    %265 = memref.load %arg4[%c21_61] : memref<32xf32, #tpu.memory_space<smem>>
    %266 = vector.broadcast %265 : f32 to vector<8x29xf32>
    %267 = arith.mulf %149, %266 : vector<8x29xf32>
    %268 = arith.addf %264, %267 : vector<8x29xf32>
    %c22_62 = arith.constant 22 : index
    %269 = memref.load %arg4[%c22_62] : memref<32xf32, #tpu.memory_space<smem>>
    %270 = vector.broadcast %269 : f32 to vector<8x29xf32>
    %271 = arith.mulf %150, %270 : vector<8x29xf32>
    %272 = arith.addf %268, %271 : vector<8x29xf32>
    %c23_63 = arith.constant 23 : index
    %273 = memref.load %arg4[%c23_63] : memref<32xf32, #tpu.memory_space<smem>>
    %274 = vector.broadcast %273 : f32 to vector<8x29xf32>
    %275 = arith.mulf %151, %274 : vector<8x29xf32>
    %276 = arith.addf %272, %275 : vector<8x29xf32>
    %cst_64 = arith.constant dense<0xFF800000> : vector<8xf32>
    %277 = vector.multi_reduction <maximumf>, %276, %cst_64 [1] : vector<8x29xf32> to vector<8xf32>
    %278 = vector.shape_cast %277 : vector<8xf32> to vector<8x1xf32>
    %c5_65 = arith.constant 5 : index
    %279 = memref.load %arg5[%c5_65] : memref<8xf32, #tpu.memory_space<smem>>
    %280 = vector.broadcast %279 : f32 to vector<8x1xf32>
    %281 = arith.addf %278, %280 : vector<8x1xf32>
    %cst_66 = arith.constant 0.000000e+00 : f32
    %282 = vector.broadcast %cst_66 : f32 to vector<8x1xf32>
    %283 = arith.maximumf %281, %282 : vector<8x1xf32>
    %c24 = arith.constant 24 : index
    %284 = memref.load %arg4[%c24] : memref<32xf32, #tpu.memory_space<smem>>
    %285 = vector.broadcast %284 : f32 to vector<8x29xf32>
    %286 = arith.mulf %148, %285 : vector<8x29xf32>
    %c25 = arith.constant 25 : index
    %287 = memref.load %arg4[%c25] : memref<32xf32, #tpu.memory_space<smem>>
    %288 = vector.broadcast %287 : f32 to vector<8x29xf32>
    %289 = arith.mulf %149, %288 : vector<8x29xf32>
    %290 = arith.addf %286, %289 : vector<8x29xf32>
    %c26 = arith.constant 26 : index
    %291 = memref.load %arg4[%c26] : memref<32xf32, #tpu.memory_space<smem>>
    %292 = vector.broadcast %291 : f32 to vector<8x29xf32>
    %293 = arith.mulf %150, %292 : vector<8x29xf32>
    %294 = arith.addf %290, %293 : vector<8x29xf32>
    %c27 = arith.constant 27 : index
    %295 = memref.load %arg4[%c27] : memref<32xf32, #tpu.memory_space<smem>>
    %296 = vector.broadcast %295 : f32 to vector<8x29xf32>
    %297 = arith.mulf %151, %296 : vector<8x29xf32>
    %298 = arith.addf %294, %297 : vector<8x29xf32>
    %cst_67 = arith.constant dense<0xFF800000> : vector<8xf32>
    %299 = vector.multi_reduction <maximumf>, %298, %cst_67 [1] : vector<8x29xf32> to vector<8xf32>
    %300 = vector.shape_cast %299 : vector<8xf32> to vector<8x1xf32>
    %c6_68 = arith.constant 6 : index
    %301 = memref.load %arg5[%c6_68] : memref<8xf32, #tpu.memory_space<smem>>
    %302 = vector.broadcast %301 : f32 to vector<8x1xf32>
    %303 = arith.addf %300, %302 : vector<8x1xf32>
    %cst_69 = arith.constant 0.000000e+00 : f32
    %304 = vector.broadcast %cst_69 : f32 to vector<8x1xf32>
    %305 = arith.maximumf %303, %304 : vector<8x1xf32>
    %c28 = arith.constant 28 : index
    %306 = memref.load %arg4[%c28] : memref<32xf32, #tpu.memory_space<smem>>
    %307 = vector.broadcast %306 : f32 to vector<8x29xf32>
    %308 = arith.mulf %148, %307 : vector<8x29xf32>
    %c29 = arith.constant 29 : index
    %309 = memref.load %arg4[%c29] : memref<32xf32, #tpu.memory_space<smem>>
    %310 = vector.broadcast %309 : f32 to vector<8x29xf32>
    %311 = arith.mulf %149, %310 : vector<8x29xf32>
    %312 = arith.addf %308, %311 : vector<8x29xf32>
    %c30 = arith.constant 30 : index
    %313 = memref.load %arg4[%c30] : memref<32xf32, #tpu.memory_space<smem>>
    %314 = vector.broadcast %313 : f32 to vector<8x29xf32>
    %315 = arith.mulf %150, %314 : vector<8x29xf32>
    %316 = arith.addf %312, %315 : vector<8x29xf32>
    %c31 = arith.constant 31 : index
    %317 = memref.load %arg4[%c31] : memref<32xf32, #tpu.memory_space<smem>>
    %318 = vector.broadcast %317 : f32 to vector<8x29xf32>
    %319 = arith.mulf %151, %318 : vector<8x29xf32>
    %320 = arith.addf %316, %319 : vector<8x29xf32>
    %cst_70 = arith.constant dense<0xFF800000> : vector<8xf32>
    %321 = vector.multi_reduction <maximumf>, %320, %cst_70 [1] : vector<8x29xf32> to vector<8xf32>
    %322 = vector.shape_cast %321 : vector<8xf32> to vector<8x1xf32>
    %c7_71 = arith.constant 7 : index
    %323 = memref.load %arg5[%c7_71] : memref<8xf32, #tpu.memory_space<smem>>
    %324 = vector.broadcast %323 : f32 to vector<8x1xf32>
    %325 = arith.addf %322, %324 : vector<8x1xf32>
    %cst_72 = arith.constant 0.000000e+00 : f32
    %326 = vector.broadcast %cst_72 : f32 to vector<8x1xf32>
    %327 = arith.maximumf %325, %326 : vector<8x1xf32>
    %328 = vector.extract_strided_slice %0 {offsets = [0, 0], sizes = [8, 28], strides = [1, 1]} : vector<8x32xf32> to vector<8x28xf32>
    %329 = vector.extract_strided_slice %0 {offsets = [0, 1], sizes = [8, 28], strides = [1, 1]} : vector<8x32xf32> to vector<8x28xf32>
    %330 = vector.extract_strided_slice %0 {offsets = [0, 2], sizes = [8, 28], strides = [1, 1]} : vector<8x32xf32> to vector<8x28xf32>
    %331 = vector.extract_strided_slice %0 {offsets = [0, 3], sizes = [8, 28], strides = [1, 1]} : vector<8x32xf32> to vector<8x28xf32>
    %332 = vector.extract_strided_slice %0 {offsets = [0, 4], sizes = [8, 28], strides = [1, 1]} : vector<8x32xf32> to vector<8x28xf32>
    %c0_73 = arith.constant 0 : index
    %333 = memref.load %arg6[%c0_73] : memref<40xf32, #tpu.memory_space<smem>>
    %334 = vector.broadcast %333 : f32 to vector<8x28xf32>
    %335 = arith.mulf %328, %334 : vector<8x28xf32>
    %c1_74 = arith.constant 1 : index
    %336 = memref.load %arg6[%c1_74] : memref<40xf32, #tpu.memory_space<smem>>
    %337 = vector.broadcast %336 : f32 to vector<8x28xf32>
    %338 = arith.mulf %329, %337 : vector<8x28xf32>
    %339 = arith.addf %335, %338 : vector<8x28xf32>
    %c2_75 = arith.constant 2 : index
    %340 = memref.load %arg6[%c2_75] : memref<40xf32, #tpu.memory_space<smem>>
    %341 = vector.broadcast %340 : f32 to vector<8x28xf32>
    %342 = arith.mulf %330, %341 : vector<8x28xf32>
    %343 = arith.addf %339, %342 : vector<8x28xf32>
    %c3_76 = arith.constant 3 : index
    %344 = memref.load %arg6[%c3_76] : memref<40xf32, #tpu.memory_space<smem>>
    %345 = vector.broadcast %344 : f32 to vector<8x28xf32>
    %346 = arith.mulf %331, %345 : vector<8x28xf32>
    %347 = arith.addf %343, %346 : vector<8x28xf32>
    %c4_77 = arith.constant 4 : index
    %348 = memref.load %arg6[%c4_77] : memref<40xf32, #tpu.memory_space<smem>>
    %349 = vector.broadcast %348 : f32 to vector<8x28xf32>
    %350 = arith.mulf %332, %349 : vector<8x28xf32>
    %351 = arith.addf %347, %350 : vector<8x28xf32>
    %cst_78 = arith.constant dense<0xFF800000> : vector<8xf32>
    %352 = vector.multi_reduction <maximumf>, %351, %cst_78 [1] : vector<8x28xf32> to vector<8xf32>
    %353 = vector.shape_cast %352 : vector<8xf32> to vector<8x1xf32>
    %c0_79 = arith.constant 0 : index
    %354 = memref.load %arg7[%c0_79] : memref<8xf32, #tpu.memory_space<smem>>
    %355 = vector.broadcast %354 : f32 to vector<8x1xf32>
    %356 = arith.addf %353, %355 : vector<8x1xf32>
    %cst_80 = arith.constant 0.000000e+00 : f32
    %357 = vector.broadcast %cst_80 : f32 to vector<8x1xf32>
    %358 = arith.maximumf %356, %357 : vector<8x1xf32>
    %c5_81 = arith.constant 5 : index
    %359 = memref.load %arg6[%c5_81] : memref<40xf32, #tpu.memory_space<smem>>
    %360 = vector.broadcast %359 : f32 to vector<8x28xf32>
    %361 = arith.mulf %328, %360 : vector<8x28xf32>
    %c6_82 = arith.constant 6 : index
    %362 = memref.load %arg6[%c6_82] : memref<40xf32, #tpu.memory_space<smem>>
    %363 = vector.broadcast %362 : f32 to vector<8x28xf32>
    %364 = arith.mulf %329, %363 : vector<8x28xf32>
    %365 = arith.addf %361, %364 : vector<8x28xf32>
    %c7_83 = arith.constant 7 : index
    %366 = memref.load %arg6[%c7_83] : memref<40xf32, #tpu.memory_space<smem>>
    %367 = vector.broadcast %366 : f32 to vector<8x28xf32>
    %368 = arith.mulf %330, %367 : vector<8x28xf32>
    %369 = arith.addf %365, %368 : vector<8x28xf32>
    %c8_84 = arith.constant 8 : index
    %370 = memref.load %arg6[%c8_84] : memref<40xf32, #tpu.memory_space<smem>>
    %371 = vector.broadcast %370 : f32 to vector<8x28xf32>
    %372 = arith.mulf %331, %371 : vector<8x28xf32>
    %373 = arith.addf %369, %372 : vector<8x28xf32>
    %c9_85 = arith.constant 9 : index
    %374 = memref.load %arg6[%c9_85] : memref<40xf32, #tpu.memory_space<smem>>
    %375 = vector.broadcast %374 : f32 to vector<8x28xf32>
    %376 = arith.mulf %332, %375 : vector<8x28xf32>
    %377 = arith.addf %373, %376 : vector<8x28xf32>
    %cst_86 = arith.constant dense<0xFF800000> : vector<8xf32>
    %378 = vector.multi_reduction <maximumf>, %377, %cst_86 [1] : vector<8x28xf32> to vector<8xf32>
    %379 = vector.shape_cast %378 : vector<8xf32> to vector<8x1xf32>
    %c1_87 = arith.constant 1 : index
    %380 = memref.load %arg7[%c1_87] : memref<8xf32, #tpu.memory_space<smem>>
    %381 = vector.broadcast %380 : f32 to vector<8x1xf32>
    %382 = arith.addf %379, %381 : vector<8x1xf32>
    %cst_88 = arith.constant 0.000000e+00 : f32
    %383 = vector.broadcast %cst_88 : f32 to vector<8x1xf32>
    %384 = arith.maximumf %382, %383 : vector<8x1xf32>
    %c10_89 = arith.constant 10 : index
    %385 = memref.load %arg6[%c10_89] : memref<40xf32, #tpu.memory_space<smem>>
    %386 = vector.broadcast %385 : f32 to vector<8x28xf32>
    %387 = arith.mulf %328, %386 : vector<8x28xf32>
    %c11_90 = arith.constant 11 : index
    %388 = memref.load %arg6[%c11_90] : memref<40xf32, #tpu.memory_space<smem>>
    %389 = vector.broadcast %388 : f32 to vector<8x28xf32>
    %390 = arith.mulf %329, %389 : vector<8x28xf32>
    %391 = arith.addf %387, %390 : vector<8x28xf32>
    %c12_91 = arith.constant 12 : index
    %392 = memref.load %arg6[%c12_91] : memref<40xf32, #tpu.memory_space<smem>>
    %393 = vector.broadcast %392 : f32 to vector<8x28xf32>
    %394 = arith.mulf %330, %393 : vector<8x28xf32>
    %395 = arith.addf %391, %394 : vector<8x28xf32>
    %c13_92 = arith.constant 13 : index
    %396 = memref.load %arg6[%c13_92] : memref<40xf32, #tpu.memory_space<smem>>
    %397 = vector.broadcast %396 : f32 to vector<8x28xf32>
    %398 = arith.mulf %331, %397 : vector<8x28xf32>
    %399 = arith.addf %395, %398 : vector<8x28xf32>
    %c14_93 = arith.constant 14 : index
    %400 = memref.load %arg6[%c14_93] : memref<40xf32, #tpu.memory_space<smem>>
    %401 = vector.broadcast %400 : f32 to vector<8x28xf32>
    %402 = arith.mulf %332, %401 : vector<8x28xf32>
    %403 = arith.addf %399, %402 : vector<8x28xf32>
    %cst_94 = arith.constant dense<0xFF800000> : vector<8xf32>
    %404 = vector.multi_reduction <maximumf>, %403, %cst_94 [1] : vector<8x28xf32> to vector<8xf32>
    %405 = vector.shape_cast %404 : vector<8xf32> to vector<8x1xf32>
    %c2_95 = arith.constant 2 : index
    %406 = memref.load %arg7[%c2_95] : memref<8xf32, #tpu.memory_space<smem>>
    %407 = vector.broadcast %406 : f32 to vector<8x1xf32>
    %408 = arith.addf %405, %407 : vector<8x1xf32>
    %cst_96 = arith.constant 0.000000e+00 : f32
    %409 = vector.broadcast %cst_96 : f32 to vector<8x1xf32>
    %410 = arith.maximumf %408, %409 : vector<8x1xf32>
    %c15_97 = arith.constant 15 : index
    %411 = memref.load %arg6[%c15_97] : memref<40xf32, #tpu.memory_space<smem>>
    %412 = vector.broadcast %411 : f32 to vector<8x28xf32>
    %413 = arith.mulf %328, %412 : vector<8x28xf32>
    %c16_98 = arith.constant 16 : index
    %414 = memref.load %arg6[%c16_98] : memref<40xf32, #tpu.memory_space<smem>>
    %415 = vector.broadcast %414 : f32 to vector<8x28xf32>
    %416 = arith.mulf %329, %415 : vector<8x28xf32>
    %417 = arith.addf %413, %416 : vector<8x28xf32>
    %c17_99 = arith.constant 17 : index
    %418 = memref.load %arg6[%c17_99] : memref<40xf32, #tpu.memory_space<smem>>
    %419 = vector.broadcast %418 : f32 to vector<8x28xf32>
    %420 = arith.mulf %330, %419 : vector<8x28xf32>
    %421 = arith.addf %417, %420 : vector<8x28xf32>
    %c18_100 = arith.constant 18 : index
    %422 = memref.load %arg6[%c18_100] : memref<40xf32, #tpu.memory_space<smem>>
    %423 = vector.broadcast %422 : f32 to vector<8x28xf32>
    %424 = arith.mulf %331, %423 : vector<8x28xf32>
    %425 = arith.addf %421, %424 : vector<8x28xf32>
    %c19_101 = arith.constant 19 : index
    %426 = memref.load %arg6[%c19_101] : memref<40xf32, #tpu.memory_space<smem>>
    %427 = vector.broadcast %426 : f32 to vector<8x28xf32>
    %428 = arith.mulf %332, %427 : vector<8x28xf32>
    %429 = arith.addf %425, %428 : vector<8x28xf32>
    %cst_102 = arith.constant dense<0xFF800000> : vector<8xf32>
    %430 = vector.multi_reduction <maximumf>, %429, %cst_102 [1] : vector<8x28xf32> to vector<8xf32>
    %431 = vector.shape_cast %430 : vector<8xf32> to vector<8x1xf32>
    %c3_103 = arith.constant 3 : index
    %432 = memref.load %arg7[%c3_103] : memref<8xf32, #tpu.memory_space<smem>>
    %433 = vector.broadcast %432 : f32 to vector<8x1xf32>
    %434 = arith.addf %431, %433 : vector<8x1xf32>
    %cst_104 = arith.constant 0.000000e+00 : f32
    %435 = vector.broadcast %cst_104 : f32 to vector<8x1xf32>
    %436 = arith.maximumf %434, %435 : vector<8x1xf32>
    %c20_105 = arith.constant 20 : index
    %437 = memref.load %arg6[%c20_105] : memref<40xf32, #tpu.memory_space<smem>>
    %438 = vector.broadcast %437 : f32 to vector<8x28xf32>
    %439 = arith.mulf %328, %438 : vector<8x28xf32>
    %c21_106 = arith.constant 21 : index
    %440 = memref.load %arg6[%c21_106] : memref<40xf32, #tpu.memory_space<smem>>
    %441 = vector.broadcast %440 : f32 to vector<8x28xf32>
    %442 = arith.mulf %329, %441 : vector<8x28xf32>
    %443 = arith.addf %439, %442 : vector<8x28xf32>
    %c22_107 = arith.constant 22 : index
    %444 = memref.load %arg6[%c22_107] : memref<40xf32, #tpu.memory_space<smem>>
    %445 = vector.broadcast %444 : f32 to vector<8x28xf32>
    %446 = arith.mulf %330, %445 : vector<8x28xf32>
    %447 = arith.addf %443, %446 : vector<8x28xf32>
    %c23_108 = arith.constant 23 : index
    %448 = memref.load %arg6[%c23_108] : memref<40xf32, #tpu.memory_space<smem>>
    %449 = vector.broadcast %448 : f32 to vector<8x28xf32>
    %450 = arith.mulf %331, %449 : vector<8x28xf32>
    %451 = arith.addf %447, %450 : vector<8x28xf32>
    %c24_109 = arith.constant 24 : index
    %452 = memref.load %arg6[%c24_109] : memref<40xf32, #tpu.memory_space<smem>>
    %453 = vector.broadcast %452 : f32 to vector<8x28xf32>
    %454 = arith.mulf %332, %453 : vector<8x28xf32>
    %455 = arith.addf %451, %454 : vector<8x28xf32>
    %cst_110 = arith.constant dense<0xFF800000> : vector<8xf32>
    %456 = vector.multi_reduction <maximumf>, %455, %cst_110 [1] : vector<8x28xf32> to vector<8xf32>
    %457 = vector.shape_cast %456 : vector<8xf32> to vector<8x1xf32>
    %c4_111 = arith.constant 4 : index
    %458 = memref.load %arg7[%c4_111] : memref<8xf32, #tpu.memory_space<smem>>
    %459 = vector.broadcast %458 : f32 to vector<8x1xf32>
    %460 = arith.addf %457, %459 : vector<8x1xf32>
    %cst_112 = arith.constant 0.000000e+00 : f32
    %461 = vector.broadcast %cst_112 : f32 to vector<8x1xf32>
    %462 = arith.maximumf %460, %461 : vector<8x1xf32>
    %c25_113 = arith.constant 25 : index
    %463 = memref.load %arg6[%c25_113] : memref<40xf32, #tpu.memory_space<smem>>
    %464 = vector.broadcast %463 : f32 to vector<8x28xf32>
    %465 = arith.mulf %328, %464 : vector<8x28xf32>
    %c26_114 = arith.constant 26 : index
    %466 = memref.load %arg6[%c26_114] : memref<40xf32, #tpu.memory_space<smem>>
    %467 = vector.broadcast %466 : f32 to vector<8x28xf32>
    %468 = arith.mulf %329, %467 : vector<8x28xf32>
    %469 = arith.addf %465, %468 : vector<8x28xf32>
    %c27_115 = arith.constant 27 : index
    %470 = memref.load %arg6[%c27_115] : memref<40xf32, #tpu.memory_space<smem>>
    %471 = vector.broadcast %470 : f32 to vector<8x28xf32>
    %472 = arith.mulf %330, %471 : vector<8x28xf32>
    %473 = arith.addf %469, %472 : vector<8x28xf32>
    %c28_116 = arith.constant 28 : index
    %474 = memref.load %arg6[%c28_116] : memref<40xf32, #tpu.memory_space<smem>>
    %475 = vector.broadcast %474 : f32 to vector<8x28xf32>
    %476 = arith.mulf %331, %475 : vector<8x28xf32>
    %477 = arith.addf %473, %476 : vector<8x28xf32>
    %c29_117 = arith.constant 29 : index
    %478 = memref.load %arg6[%c29_117] : memref<40xf32, #tpu.memory_space<smem>>
    %479 = vector.broadcast %478 : f32 to vector<8x28xf32>
    %480 = arith.mulf %332, %479 : vector<8x28xf32>
    %481 = arith.addf %477, %480 : vector<8x28xf32>
    %cst_118 = arith.constant dense<0xFF800000> : vector<8xf32>
    %482 = vector.multi_reduction <maximumf>, %481, %cst_118 [1] : vector<8x28xf32> to vector<8xf32>
    %483 = vector.shape_cast %482 : vector<8xf32> to vector<8x1xf32>
    %c5_119 = arith.constant 5 : index
    %484 = memref.load %arg7[%c5_119] : memref<8xf32, #tpu.memory_space<smem>>
    %485 = vector.broadcast %484 : f32 to vector<8x1xf32>
    %486 = arith.addf %483, %485 : vector<8x1xf32>
    %cst_120 = arith.constant 0.000000e+00 : f32
    %487 = vector.broadcast %cst_120 : f32 to vector<8x1xf32>
    %488 = arith.maximumf %486, %487 : vector<8x1xf32>
    %c30_121 = arith.constant 30 : index
    %489 = memref.load %arg6[%c30_121] : memref<40xf32, #tpu.memory_space<smem>>
    %490 = vector.broadcast %489 : f32 to vector<8x28xf32>
    %491 = arith.mulf %328, %490 : vector<8x28xf32>
    %c31_122 = arith.constant 31 : index
    %492 = memref.load %arg6[%c31_122] : memref<40xf32, #tpu.memory_space<smem>>
    %493 = vector.broadcast %492 : f32 to vector<8x28xf32>
    %494 = arith.mulf %329, %493 : vector<8x28xf32>
    %495 = arith.addf %491, %494 : vector<8x28xf32>
    %c32 = arith.constant 32 : index
    %496 = memref.load %arg6[%c32] : memref<40xf32, #tpu.memory_space<smem>>
    %497 = vector.broadcast %496 : f32 to vector<8x28xf32>
    %498 = arith.mulf %330, %497 : vector<8x28xf32>
    %499 = arith.addf %495, %498 : vector<8x28xf32>
    %c33 = arith.constant 33 : index
    %500 = memref.load %arg6[%c33] : memref<40xf32, #tpu.memory_space<smem>>
    %501 = vector.broadcast %500 : f32 to vector<8x28xf32>
    %502 = arith.mulf %331, %501 : vector<8x28xf32>
    %503 = arith.addf %499, %502 : vector<8x28xf32>
    %c34 = arith.constant 34 : index
    %504 = memref.load %arg6[%c34] : memref<40xf32, #tpu.memory_space<smem>>
    %505 = vector.broadcast %504 : f32 to vector<8x28xf32>
    %506 = arith.mulf %332, %505 : vector<8x28xf32>
    %507 = arith.addf %503, %506 : vector<8x28xf32>
    %cst_123 = arith.constant dense<0xFF800000> : vector<8xf32>
    %508 = vector.multi_reduction <maximumf>, %507, %cst_123 [1] : vector<8x28xf32> to vector<8xf32>
    %509 = vector.shape_cast %508 : vector<8xf32> to vector<8x1xf32>
    %c6_124 = arith.constant 6 : index
    %510 = memref.load %arg7[%c6_124] : memref<8xf32, #tpu.memory_space<smem>>
    %511 = vector.broadcast %510 : f32 to vector<8x1xf32>
    %512 = arith.addf %509, %511 : vector<8x1xf32>
    %cst_125 = arith.constant 0.000000e+00 : f32
    %513 = vector.broadcast %cst_125 : f32 to vector<8x1xf32>
    %514 = arith.maximumf %512, %513 : vector<8x1xf32>
    %c35 = arith.constant 35 : index
    %515 = memref.load %arg6[%c35] : memref<40xf32, #tpu.memory_space<smem>>
    %516 = vector.broadcast %515 : f32 to vector<8x28xf32>
    %517 = arith.mulf %328, %516 : vector<8x28xf32>
    %c36 = arith.constant 36 : index
    %518 = memref.load %arg6[%c36] : memref<40xf32, #tpu.memory_space<smem>>
    %519 = vector.broadcast %518 : f32 to vector<8x28xf32>
    %520 = arith.mulf %329, %519 : vector<8x28xf32>
    %521 = arith.addf %517, %520 : vector<8x28xf32>
    %c37 = arith.constant 37 : index
    %522 = memref.load %arg6[%c37] : memref<40xf32, #tpu.memory_space<smem>>
    %523 = vector.broadcast %522 : f32 to vector<8x28xf32>
    %524 = arith.mulf %330, %523 : vector<8x28xf32>
    %525 = arith.addf %521, %524 : vector<8x28xf32>
    %c38 = arith.constant 38 : index
    %526 = memref.load %arg6[%c38] : memref<40xf32, #tpu.memory_space<smem>>
    %527 = vector.broadcast %526 : f32 to vector<8x28xf32>
    %528 = arith.mulf %331, %527 : vector<8x28xf32>
    %529 = arith.addf %525, %528 : vector<8x28xf32>
    %c39 = arith.constant 39 : index
    %530 = memref.load %arg6[%c39] : memref<40xf32, #tpu.memory_space<smem>>
    %531 = vector.broadcast %530 : f32 to vector<8x28xf32>
    %532 = arith.mulf %332, %531 : vector<8x28xf32>
    %533 = arith.addf %529, %532 : vector<8x28xf32>
    %cst_126 = arith.constant dense<0xFF800000> : vector<8xf32>
    %534 = vector.multi_reduction <maximumf>, %533, %cst_126 [1] : vector<8x28xf32> to vector<8xf32>
    %535 = vector.shape_cast %534 : vector<8xf32> to vector<8x1xf32>
    %c7_127 = arith.constant 7 : index
    %536 = memref.load %arg7[%c7_127] : memref<8xf32, #tpu.memory_space<smem>>
    %537 = vector.broadcast %536 : f32 to vector<8x1xf32>
    %538 = arith.addf %535, %537 : vector<8x1xf32>
    %cst_128 = arith.constant 0.000000e+00 : f32
    %539 = vector.broadcast %cst_128 : f32 to vector<8x1xf32>
    %540 = arith.maximumf %538, %539 : vector<8x1xf32>
    %cst_129 = arith.constant 0.000000e+00 : f32
    %541 = vector.broadcast %cst_129 : f32 to vector<8x104xf32>
    %542 = tpu.concatenate %21, %39, %57, %75, %93, %111, %129, %147, %173, %195, %217, %239, %261, %283, %305, %327 in 1 : vector<8x1xf32>, vector<8x1xf32>, vector<8x1xf32>, vector<8x1xf32>, vector<8x1xf32>, vector<8x1xf32>, vector<8x1xf32>, vector<8x1xf32>, vector<8x1xf32>, vector<8x1xf32>, vector<8x1xf32>, vector<8x1xf32>, vector<8x1xf32>, vector<8x1xf32>, vector<8x1xf32>, vector<8x1xf32> -> vector<8x16xf32>
    %543 = tpu.concatenate %358, %384, %410, %436, %462, %488, %514, %540, %541 in 1 : vector<8x1xf32>, vector<8x1xf32>, vector<8x1xf32>, vector<8x1xf32>, vector<8x1xf32>, vector<8x1xf32>, vector<8x1xf32>, vector<8x1xf32>, vector<8x104xf32> -> vector<8x112xf32>
    %544 = tpu.concatenate %542, %543 in 1 : vector<8x16xf32>, vector<8x112xf32> -> vector<8x128xf32>
    %c0_130 = arith.constant 0 : index
    %c0_131 = arith.constant 0 : index
    %545 = vector.load %arg8[%c0_130, %c0_131] : memref<128x128xf32, #tpu.memory_space<vmem>>, vector<128x128xf32>
    %cst_132 = arith.constant dense<0.000000e+00> : vector<8x128xf32>
    %546 = tpu.matmul %544, %545, %cst_132 {dimension_numbers = #tpu.dot_dimension_numbers<[1], [0], [0], [1], [0, 0, 1, 1], [], []>} : vector<8x128xf32>, vector<128x128xf32>, vector<8x128xf32> -> vector<8x128xf32>
    %c0_133 = arith.constant 0 : index
    %c0_134 = arith.constant 0 : index
    %547 = vector.load %arg9[%c0_133, %c0_134] : memref<1x128xf32, #tpu.memory_space<vmem>>, vector<1x128xf32>
    %548 = vector.broadcast %547 : vector<1x128xf32> to vector<8x128xf32>
    %549 = arith.addf %546, %548 : vector<8x128xf32>
    %c0_135 = arith.constant 0 : index
    %c0_136 = arith.constant 0 : index
    %550 = vector.load %arg10[%c0_135, %c0_136] : memref<8x128xf32, #tpu.memory_space<vmem>>, vector<8x128xf32>
    tpu.vector_store %arg10[%c0_135, %c0_136], %549 {strides = array<i32>} : memref<8x128xf32, #tpu.memory_space<vmem>>, vector<8x128xf32>,
    return
  }
  func.func @transform_0(%arg0: i32) -> (i32, i32) {
    %c0_i32 = arith.constant 0 : i32
    %c0_i32_0 = arith.constant 0 : i32
    return %arg0, %c0_i32 : i32, i32
  }
  func.func @transform_1(%arg0: i32) -> i32 {
    %c0_i32 = arith.constant 0 : i32
    %c0_i32_0 = arith.constant 0 : i32
    return %c0_i32 : i32
  }
  func.func @transform_2(%arg0: i32) -> i32 {
    %c0_i32 = arith.constant 0 : i32
    %c0_i32_0 = arith.constant 0 : i32
    return %c0_i32 : i32
  }
  func.func @transform_3(%arg0: i32) -> i32 {
    %c0_i32 = arith.constant 0 : i32
    %c0_i32_0 = arith.constant 0 : i32
    return %c0_i32 : i32
  }
  func.func @transform_4(%arg0: i32) -> i32 {
    %c0_i32 = arith.constant 0 : i32
    %c0_i32_0 = arith.constant 0 : i32
    return %c0_i32 : i32
  }
  func.func @transform_5(%arg0: i32) -> i32 {
    %c0_i32 = arith.constant 0 : i32
    %c0_i32_0 = arith.constant 0 : i32
    return %c0_i32 : i32
  }
  func.func @transform_6(%arg0: i32) -> i32 {
    %c0_i32 = arith.constant 0 : i32
    %c0_i32_0 = arith.constant 0 : i32
    return %c0_i32 : i32
  }
  func.func @transform_7(%arg0: i32) -> (i32, i32) {
    %c0_i32 = arith.constant 0 : i32
    %c0_i32_0 = arith.constant 0 : i32
    %c0_i32_1 = arith.constant 0 : i32
    return %c0_i32, %c0_i32_0 : i32, i32
  }
  func.func @transform_8(%arg0: i32) -> (i32, i32) {
    %c0_i32 = arith.constant 0 : i32
    %c0_i32_0 = arith.constant 0 : i32
    %c0_i32_1 = arith.constant 0 : i32
    return %c0_i32, %c0_i32_0 : i32, i32
  }
  func.func @transform_9(%arg0: i32) -> (i32, i32) {
    %c0_i32 = arith.constant 0 : i32
    %c0_i32_0 = arith.constant 0 : i32
    return %arg0, %c0_i32 : i32, i32
  }
}

</mosaic_0001>

<llo_original>
// kernel: tpu_custom_call.1
$region0: #{tpu_custom_call.1}
  #allocation0 [shape = 'u32[]', space=smem, size = 0x4, offset = 0x4, fixed_abs, tag = 'smem constant byte address 0x4 - core index']
  #allocation1 [shape = 'u32[72,128]{1,0:T(1,128)}', space=vmem, size = 0x9000, scoped, tag = 'internal scratch']
  %s0 = inlined_call_operand.hbm [shape: f32[16,32], index: 0, kind: input, shape index: {}]
  %s1 = inlined_call_operand.hbm [shape: f32[24], index: 1, kind: input, shape index: {}]
  %s2 = inlined_call_operand.vmem [shape: f32[8], index: 2, kind: input, shape index: {}]
  %s3 = inlined_call_operand.vmem [shape: f32[32], index: 3, kind: input, shape index: {}]
  %s4 = inlined_call_operand.vmem [shape: f32[8], index: 4, kind: input, shape index: {}]
  %s5 = inlined_call_operand.vmem [shape: f32[40], index: 5, kind: input, shape index: {}]
  %s6 = inlined_call_operand.vmem [shape: f32[8], index: 6, kind: input, shape index: {}]
  %s7 = inlined_call_operand.hbm [shape: f32[128,128], index: 7, kind: input, shape index: {}]
  %s8 = inlined_call_operand.vmem [shape: f32[1,128], index: 8, kind: input, shape index: {}]
  %s9 = inlined_call_operand.hbm [shape: f32[16,128], index: 9, kind: output, shape index: {}]
  %s10 = sld [smem:[#allocation0]]
  $region101: #{tpu_custom_call.1} parent=0
    _
  %s12 = ssub.s32 1, %s10
  %s13 = scalar_select 0, %s12, %s10
  $region1: #{tpu_custom_call.1} parent=0
    #allocation2 [shape = 'u8[8192]{0}', space=vmem, size = 0x2000, scoped, tag = 'input window, operand 0']
    #allocation3 [shape = 's32[2]{0}', space=sflag, size = 0x8, scoped, tag = 'scoped memory for tpu_custom_call.1']
    #allocation4 [shape = 's32[2]{0}', space=sflag, size = 0x8, scoped, tag = 'scoped memory for tpu_custom_call.1']
    #allocation5 [shape = 's32[2]{0}', space=sflag, size = 0x8, scoped, tag = 'scoped memory for tpu_custom_call.1']
    #allocation6 [shape = 's32[2]{0}', space=sflag, size = 0x8, scoped, tag = 'scoped memory for tpu_custom_call.1']
    #allocation7 [shape = 'u8[512]{0}', space=smem, size = 0x200, scoped, tag = 'input window, operand 1, single buffered']
    #allocation8 [shape = 'u8[512]{0}', space=smem, size = 0x200, scoped, tag = 'input window, operand 2, single buffered']
    #allocation9 [shape = 'u8[512]{0}', space=smem, size = 0x200, scoped, tag = 'input window, operand 3, single buffered']
    #allocation10 [shape = 's32[1]{0}', space=sflag, size = 0x4, scoped, tag = 'scoped memory for tpu_custom_call.1']
    #allocation11 [shape = 'u8[512]{0}', space=smem, size = 0x200, scoped, tag = 'input window, operand 4, single buffered']
    #allocation12 [shape = 'u8[512]{0}', space=smem, size = 0x200, scoped, tag = 'input window, operand 5, single buffered']
    #allocation13 [shape = 's32[1]{0}', space=sflag, size = 0x4, scoped, tag = 'scoped memory for tpu_custom_call.1']
    #allocation14 [shape = 'u8[512]{0}', space=smem, size = 0x200, scoped, tag = 'input window, operand 6, single buffered']
    #allocation15 [shape = 'u8[65536]{0}', space=vmem, size = 0x10000, scoped, tag = 'input window, operand 7, single buffered']
    #allocation16 [shape = 's32[1]{0}', space=sflag, size = 0x4, scoped, tag = 'scoped memory for tpu_custom_call.1']
    #allocation17 [shape = 'u8[8192]{0}', space=vmem, size = 0x2000, scoped, tag = 'output window, operand 0']
    %14 = vsyncpa [#allocation3], 0
    %s15 = scalar_lea.sflag [#allocation3], 1
    %16 = vsyncpa %s15, 0
    %17 = vsyncpa [#allocation5], 0
    %18 = vsyncpa [#allocation6], 0
    %19 = vsyncpa [#allocation10], 0
    %20 = vsyncpa [#allocation13], 0
    %21 = vsyncpa [#allocation16], 0
    %22 = vsyncpa [#allocation4], 0
    %s23 = scalar_lea.sflag [#allocation4], 1
    %24 = vsyncpa %s23, 0
    loop: start=0, step=1, limit=4
    $region2: #{tpu_custom_call.1} parent=1 // loop_pre_header
      _
    $region3: #{tpu_custom_call.1} parent=1 // loop_header
      %s26 = sphi 0, %s30
      %p27 = scmp.ge.s32.totalorder %s26, 4
      %s36 = sphi 0, %s38
      %s39 = sphi 0, %s36
      %s40 = sphi 0, %s39
      %s56 = sphi 0, %s40
      %s60 = sphi 0, %s60
      %s62 = sphi 0, %s60
      %s63 = sphi 0, %s62
      %s77 = sphi 0, %s63
      %s81 = sphi 0, %s81
      %s83 = sphi 0, %s81
      %s84 = sphi 0, %s83
      %s98 = sphi 0, %s84
      %s102 = sphi 0, %s102
      %s104 = sphi 0, %s102
      %s105 = sphi 0, %s104
      %s119 = sphi 0, %s105
      %s123 = sphi 0, %s123
      %s125 = sphi 0, %s123
      %s126 = sphi 0, %s125
      %s140 = sphi 0, %s126
      %s144 = sphi 0, %s144
      %s146 = sphi 0, %s144
      %s147 = sphi 0, %s146
      %s161 = sphi 0, %s147
      %s165 = sphi 0, %s165
      %s167 = sphi 0, %s165
      %s168 = sphi 0, %s167
      %s182 = sphi 0, %s168
      %s186 = sphi 0, %s186
      %s188 = sphi 0, %s186
      %s189 = sphi 0, %s188
      %s203 = sphi 0, %s189
      %s207 = sphi 0, %s207
      %s209 = sphi 0, %s207
      %s210 = sphi 0, %s209
      %s224 = sphi 0, %s210
      %s230 = sphi 0, %s232
      %s233 = sphi 0, %s230
      %s234 = sphi 0, %s233
      %s250 = sphi 0, %s234
    $region4: #{tpu_custom_call.1} parent=1 // loop_header_branch
      %29 = sbr.rel (%p27) target = $region8
    $region5: #{tpu_custom_call.1} parent=1 // loop_body
      %s31 = ssub.s32 %s26, 1
      %s32 = ssub.s32 %s26, 2
      %s33 = sadd.s32 %s26, 1
      %s34 = ssub.s32 %s26, %s33
      %p35 = scmp.eq.s32.totalorder %s34, 0
      %s37 = sadd.s32 %s36, 1
      %s38 = scalar_select %p35, %s36, %s37
      %p41 = pneg %p35
      %p42 = scmp.eq.s32.totalorder %s26, 1
      %p43 = por %p41, %p42
      %p44 = scmp.ne.s32.totalorder %s36, %s39
      %p45 = scmp.eq.s32.totalorder %s26, 0
      %p46 = por %p44, %p45
      %p47 = scmp.ne.s32.totalorder %s36, %s39
      %p48 = scmp.eq.s32.totalorder %s31, 1
      %p49 = por %p47, %p48
      %p50 = scmp.ne.s32.totalorder %s39, %s40
      %p51 = scmp.eq.s32.totalorder %s31, 0
      %p52 = por %p50, %p51
      %p53 = scmp.ne.s32.totalorder %s39, %s40
      %p54 = scmp.eq.s32.totalorder %s32, 1
      %p55 = por %p53, %p54
      %p57 = scmp.ne.s32.totalorder %s40, %s56
      %p58 = scmp.eq.s32.totalorder %s32, 0
      %p59 = por %p57, %p58
      %s61 = sadd.s32 %s60, 1
      %p64 = scmp.eq.s32.totalorder %s26, 1
      %p65 = scmp.ne.s32.totalorder %s60, %s62
      %p66 = scmp.eq.s32.totalorder %s26, 0
      %p67 = por %p65, %p66
      %p68 = scmp.ne.s32.totalorder %s60, %s62
      %p69 = scmp.eq.s32.totalorder %s31, 1
      %p70 = por %p68, %p69
      %p71 = scmp.ne.s32.totalorder %s62, %s63
      %p72 = scmp.eq.s32.totalorder %s31, 0
      %p73 = por %p71, %p72
      %p74 = scmp.ne.s32.totalorder %s62, %s63
      %p75 = scmp.eq.s32.totalorder %s32, 1
      %p76 = por %p74, %p75
      %p78 = scmp.ne.s32.totalorder %s63, %s77
      %p79 = scmp.eq.s32.totalorder %s32, 0
      %p80 = por %p78, %p79
      %s82 = sadd.s32 %s81, 1
      %p85 = scmp.eq.s32.totalorder %s26, 1
      %p86 = scmp.ne.s32.totalorder %s81, %s83
      %p87 = scmp.eq.s32.totalorder %s26, 0
      %p88 = por %p86, %p87
      %p89 = scmp.ne.s32.totalorder %s81, %s83
      %p90 = scmp.eq.s32.totalorder %s31, 1
      %p91 = por %p89, %p90
      %p92 = scmp.ne.s32.totalorder %s83, %s84
      %p93 = scmp.eq.s32.totalorder %s31, 0
      %p94 = por %p92, %p93
      %p95 = scmp.ne.s32.totalorder %s83, %s84
      %p96 = scmp.eq.s32.totalorder %s32, 1
      %p97 = por %p95, %p96
      %p99 = scmp.ne.s32.totalorder %s84, %s98
      %p100 = scmp.eq.s32.totalorder %s32, 0
      %p101 = por %p99, %p100
      %s103 = sadd.s32 %s102, 1
      %p106 = scmp.eq.s32.totalorder %s26, 1
      %p107 = scmp.ne.s32.totalorder %s102, %s104
      %p108 = scmp.eq.s32.totalorder %s26, 0
      %p109 = por %p107, %p108
      %p110 = scmp.ne.s32.totalorder %s102, %s104
      %p111 = scmp.eq.s32.totalorder %s31, 1
      %p112 = por %p110, %p111
      %p113 = scmp.ne.s32.totalorder %s104, %s105
      %p114 = scmp.eq.s32.totalorder %s31, 0
      %p115 = por %p113, %p114
      %p116 = scmp.ne.s32.totalorder %s104, %s105
      %p117 = scmp.eq.s32.totalorder %s32, 1
      %p118 = por %p116, %p117
      %p120 = scmp.ne.s32.totalorder %s105, %s119
      %p121 = scmp.eq.s32.totalorder %s32, 0
      %p122 = por %p120, %p121
      %s124 = sadd.s32 %s123, 1
      %p127 = scmp.eq.s32.totalorder %s26, 1
      %p128 = scmp.ne.s32.totalorder %s123, %s125
      %p129 = scmp.eq.s32.totalorder %s26, 0
      %p130 = por %p128, %p129
      %p131 = scmp.ne.s32.totalorder %s123, %s125
      %p132 = scmp.eq.s32.totalorder %s31, 1
      %p133 = por %p131, %p132
      %p134 = scmp.ne.s32.totalorder %s125, %s126
      %p135 = scmp.eq.s32.totalorder %s31, 0
      %p136 = por %p134, %p135
      %p137 = scmp.ne.s32.totalorder %s125, %s126
      %p138 = scmp.eq.s32.totalorder %s32, 1
      %p139 = por %p137, %p138
      %p141 = scmp.ne.s32.totalorder %s126, %s140
      %p142 = scmp.eq.s32.totalorder %s32, 0
      %p143 = por %p141, %p142
      %s145 = sadd.s32 %s144, 1
      %p148 = scmp.eq.s32.totalorder %s26, 1
      %p149 = scmp.ne.s32.totalorder %s144, %s146
      %p150 = scmp.eq.s32.totalorder %s26, 0
      %p151 = por %p149, %p150
      %p152 = scmp.ne.s32.totalorder %s144, %s146
      %p153 = scmp.eq.s32.totalorder %s31, 1
      %p154 = por %p152, %p153
      %p155 = scmp.ne.s32.totalorder %s146, %s147
      %p156 = scmp.eq.s32.totalorder %s31, 0
      %p157 = por %p155, %p156
      %p158 = scmp.ne.s32.totalorder %s146, %s147
      %p159 = scmp.eq.s32.totalorder %s32, 1
      %p160 = por %p158, %p159
      %p162 = scmp.ne.s32.totalorder %s147, %s161
      %p163 = scmp.eq.s32.totalorder %s32, 0
      %p164 = por %p162, %p163
      %s166 = sadd.s32 %s165, 1
      %p169 = scmp.eq.s32.totalorder %s26, 1
      %p170 = scmp.ne.s32.totalorder %s165, %s167
      %p171 = scmp.eq.s32.totalorder %s26, 0
      %p172 = por %p170, %p171
      %p173 = scmp.ne.s32.totalorder %s165, %s167
      %p174 = scmp.eq.s32.totalorder %s31, 1
      %p175 = por %p173, %p174
      %p176 = scmp.ne.s32.totalorder %s167, %s168
      %p177 = scmp.eq.s32.totalorder %s31, 0
      %p178 = por %p176, %p177
      %p179 = scmp.ne.s32.totalorder %s167, %s168
      %p180 = scmp.eq.s32.totalorder %s32, 1
      %p181 = por %p179, %p180
      %p183 = scmp.ne.s32.totalorder %s168, %s182
      %p184 = scmp.eq.s32.totalorder %s32, 0
      %p185 = por %p183, %p184
      %s187 = sadd.s32 %s186, 1
      %p190 = scmp.eq.s32.totalorder %s26, 1
      %p191 = scmp.ne.s32.totalorder %s186, %s188
      %p192 = scmp.eq.s32.totalorder %s26, 0
      %p193 = por %p191, %p192
      %p194 = scmp.ne.s32.totalorder %s186, %s188
      %p195 = scmp.eq.s32.totalorder %s31, 1
      %p196 = por %p194, %p195
      %p197 = scmp.ne.s32.totalorder %s188, %s189
      %p198 = scmp.eq.s32.totalorder %s31, 0
      %p199 = por %p197, %p198
      %p200 = scmp.ne.s32.totalorder %s188, %s189
      %p201 = scmp.eq.s32.totalorder %s32, 1
      %p202 = por %p200, %p201
      %p204 = scmp.ne.s32.totalorder %s189, %s203
      %p205 = scmp.eq.s32.totalorder %s32, 0
      %p206 = por %p204, %p205
      %s208 = sadd.s32 %s207, 1
      %p211 = scmp.eq.s32.totalorder %s26, 1
      %p212 = scmp.ne.s32.totalorder %s207, %s209
      %p213 = scmp.eq.s32.totalorder %s26, 0
      %p214 = por %p212, %p213
      %p215 = scmp.ne.s32.totalorder %s207, %s209
      %p216 = scmp.eq.s32.totalorder %s31, 1
      %p217 = por %p215, %p216
      %p218 = scmp.ne.s32.totalorder %s209, %s210
      %p219 = scmp.eq.s32.totalorder %s31, 0
      %p220 = por %p218, %p219
      %p221 = scmp.ne.s32.totalorder %s209, %s210
      %p222 = scmp.eq.s32.totalorder %s32, 1
      %p223 = por %p221, %p222
      %p225 = scmp.ne.s32.totalorder %s210, %s224
      %p226 = scmp.eq.s32.totalorder %s32, 0
      %p227 = por %p225, %p226
      %s228 = ssub.s32 %s26, %s33
      %p229 = scmp.eq.s32.totalorder %s228, 0
      %s231 = sadd.s32 %s230, 1
      %s232 = scalar_select %p229, %s230, %s231
      %p235 = pneg %p229
      %p236 = scmp.eq.s32.totalorder %s26, 1
      %p237 = por %p235, %p236
      %p238 = scmp.ne.s32.totalorder %s230, %s233
      %p239 = scmp.eq.s32.totalorder %s26, 0
      %p240 = por %p238, %p239
      %p241 = scmp.ne.s32.totalorder %s230, %s233
      %p242 = scmp.eq.s32.totalorder %s31, 1
      %p243 = por %p241, %p242
      %p244 = scmp.ne.s32.totalorder %s233, %s234
      %p245 = scmp.eq.s32.totalorder %s31, 0
      %p246 = por %p244, %p245
      %p247 = scmp.ne.s32.totalorder %s233, %s234
      %p248 = scmp.eq.s32.totalorder %s32, 1
      %p249 = por %p247, %p248
      %p251 = scmp.ne.s32.totalorder %s234, %s250
      %p252 = scmp.eq.s32.totalorder %s32, 0
      %p253 = por %p251, %p252
      %p254 = scmp.le.s32.totalorder 1, %s26
      %p255 = scmp.lt.s32.totalorder %s26, 3
      %p256 = pnand %p254, %p255
      %p257 = pneg %p256
      // Predicated region
      $region9: #{tpu_custom_call.1} parent=5 // pred_check
        _
      $region10: #{tpu_custom_call.1} parent=5 // pred_check_branch
        %259 = sbr.rel (%p256) target = $region12
      $region11: #{tpu_custom_call.1} parent=5 // pred_region
        %s260 = ssub.s32 %s26, 1
        // Predicated region
        $region13: #{tpu_custom_call.1} parent=11 // pred_check
          %p261 = pneg %p73
        $region14: #{tpu_custom_call.1} parent=11 // pred_check_branch
          %263 = sbr.rel (%p261) target = $region16
        $region15: #{tpu_custom_call.1} parent=11 // pred_region
          %265 = vsyncadd [#allocation5], 0
          %s267 = sshll.u32 %s1, 4
          %s268 = int_to_ptr.hbm [resolvable:$true] %s267
          %270 = dma.hbm_to_smem %s268, 16, [#allocation7], [#allocation5]
        $region16: #{tpu_custom_call.1} parent=11 // pred_fallthru
          _
        // Predicated region
        $region17: #{tpu_custom_call.1} parent=11 // pred_check
          %p271 = pneg %p94
        $region18: #{tpu_custom_call.1} parent=11 // pred_check_branch
          %273 = sbr.rel (%p271) target = $region20
        $region19: #{tpu_custom_call.1} parent=11 // pred_region
          %275 = vsyncadd [#allocation6], 0
          %s277 = sshll.u32 %s2, 4
          %s278 = int_to_ptr.vmem [resolvable:$true] %s277
          %280 = dma.vmem_to_smem %s278, 16, [#allocation8], [#allocation6]
        $region20: #{tpu_custom_call.1} parent=11 // pred_fallthru
          _
        // Predicated region
        $region21: #{tpu_custom_call.1} parent=11 // pred_check
          %p281 = pneg %p115
        $region22: #{tpu_custom_call.1} parent=11 // pred_check_branch
          %283 = sbr.rel (%p281) target = $region24
        $region23: #{tpu_custom_call.1} parent=11 // pred_region
          %285 = vsyncadd [#allocation10], 0
          %s287 = sshll.u32 %s3, 4
          %s288 = int_to_ptr.vmem [resolvable:$true] %s287
          %290 = dma.vmem_to_smem %s288, 16, [#allocation9], [#allocation10]
        $region24: #{tpu_custom_call.1} parent=11 // pred_fallthru
          _
        // Predicated region
        $region25: #{tpu_custom_call.1} parent=11 // pred_check
          %p291 = pneg %p136
        $region26: #{tpu_custom_call.1} parent=11 // pred_check_branch
          %293 = sbr.rel (%p291) target = $region28
        $region27: #{tpu_custom_call.1} parent=11 // pred_region
          %295 = vsyncadd [#allocation10], 0
          %s297 = sshll.u32 %s4, 4
          %s298 = int_to_ptr.vmem [resolvable:$true] %s297
          %300 = dma.vmem_to_smem %s298, 16, [#allocation11], [#allocation10]
        $region28: #{tpu_custom_call.1} parent=11 // pred_fallthru
          _
        // Predicated region
        $region29: #{tpu_custom_call.1} parent=11 // pred_check
          %p301 = pneg %p157
        $region30: #{tpu_custom_call.1} parent=11 // pred_check_branch
          %303 = sbr.rel (%p301) target = $region32
        $region31: #{tpu_custom_call.1} parent=11 // pred_region
          %305 = vsyncadd [#allocation13], 0
          %s307 = sshll.u32 %s5, 4
          %s308 = int_to_ptr.vmem [resolvable:$true] %s307
          %310 = dma.vmem_to_smem %s308, 16, [#allocation12], [#allocation13]
        $region32: #{tpu_custom_call.1} parent=11 // pred_fallthru
          _
        // Predicated region
        $region33: #{tpu_custom_call.1} parent=11 // pred_check
          %p311 = pneg %p178
        $region34: #{tpu_custom_call.1} parent=11 // pred_check_branch
          %313 = sbr.rel (%p311) target = $region36
        $region35: #{tpu_custom_call.1} parent=11 // pred_region
          %315 = vsyncadd [#allocation13], 0
          %s317 = sshll.u32 %s6, 4
          %s318 = int_to_ptr.vmem [resolvable:$true] %s317
          %320 = dma.vmem_to_smem %s318, 16, [#allocation14], [#allocation13]
        $region36: #{tpu_custom_call.1} parent=11 // pred_fallthru
          _
        // Predicated region
        $region37: #{tpu_custom_call.1} parent=11 // pred_check
          %p321 = pneg %p199
        $region38: #{tpu_custom_call.1} parent=11 // pred_check_branch
          %323 = sbr.rel (%p321) target = $region40
        $region39: #{tpu_custom_call.1} parent=11 // pred_region
          %325 = vsyncadd [#allocation16], 0
          %s326 = sshll.u32 %s7, 4
          %s327 = int_to_ptr.hbm [resolvable:$true] %s326
          %s328 = sshll.u32 [#allocation15], 4
          %s329 = int_to_ptr.vmem [resolvable:$true] %s328
          %334 = dma.hbm_to_vmem [thread:$0]  %s327, 2048, %s329, [#allocation16], 128, 128, 8
        $region40: #{tpu_custom_call.1} parent=11 // pred_fallthru
          _
        // Predicated region
        $region41: #{tpu_custom_call.1} parent=11 // pred_check
          %p335 = pneg %p220
        $region42: #{tpu_custom_call.1} parent=11 // pred_check_branch
          %337 = sbr.rel (%p335) target = $region44
        $region43: #{tpu_custom_call.1} parent=11 // pred_region
          _
        $region44: #{tpu_custom_call.1} parent=11 // pred_fallthru
          _
      $region12: #{tpu_custom_call.1} parent=5 // pred_fallthru
        _
      %p338 = scmp.lt.s32.totalorder %s26, 2
      // Predicated region
      $region45: #{tpu_custom_call.1} parent=5 // pred_check
        %p339 = pneg %p338
      $region46: #{tpu_custom_call.1} parent=5 // pred_check_branch
        %341 = sbr.rel (%p339) target = $region48
      $region47: #{tpu_custom_call.1} parent=5 // pred_region
        // Predicated region
        $region49: #{tpu_custom_call.1} parent=47 // pred_check
          %p342 = pneg %p46
        $region50: #{tpu_custom_call.1} parent=47 // pred_check_branch
          %344 = sbr.rel (%p342) target = $region52
        $region51: #{tpu_custom_call.1} parent=47 // pred_region
          %s345 = sand.u32 %s36, 1
          %s346 = scalar_lea.sflag [#allocation3], %s345
          %s347 = sand.u32 %s36, 1
          %s348 = smul.addr %s347, 8
          %s349 = scalar_lea.vmem [#allocation2], %s348
          %351 = vsyncadd %s346, 0
          %s352 = smul.addr %s26, 8
          %s353 = scalar_lea.hbm %s0, %s352
          %s355 = sshll.u32 %s353, 4
          %s356 = int_to_ptr.hbm [resolvable:$true] %s355
          %s357 = sshll.u32 %s349, 4
          %s358 = int_to_ptr.vmem [resolvable:$true] %s357
          %360 = dma.hbm_to_vmem [thread:$0]  %s356, 128, %s358, %s346
        $region52: #{tpu_custom_call.1} parent=47 // pred_fallthru
          _
      $region48: #{tpu_custom_call.1} parent=5 // pred_fallthru
        _
      %p361 = scmp.le.s32.totalorder 1, %s26
      %p362 = scmp.lt.s32.totalorder %s26, 3
      %p363 = pnand %p361, %p362
      %p364 = pneg %p363
      // Predicated region
      $region53: #{tpu_custom_call.1} parent=5 // pred_check
        _
      $region54: #{tpu_custom_call.1} parent=5 // pred_check_branch
        %366 = sbr.rel (%p363) target = $region56
      $region55: #{tpu_custom_call.1} parent=5 // pred_region
        %s367 = ssub.s32 %s26, 1
        %s368 = sand.u32 %s39, 1
        %s369 = scalar_lea.sflag [#allocation3], %s368
        %s370 = sand.u32 %s39, 1
        %s371 = smul.addr %s370, 8
        %s372 = scalar_lea.vmem [#allocation2], %s371
        // Predicated region
        $region57: #{tpu_custom_call.1} parent=55 // pred_check
          %p373 = pneg %p52
        $region58: #{tpu_custom_call.1} parent=55 // pred_check_branch
          %375 = sbr.rel (%p373) target = $region60
        $region59: #{tpu_custom_call.1} parent=55 // pred_region
          %377 = dma.done %s369, 128
        $region60: #{tpu_custom_call.1} parent=55 // pred_fallthru
          _
        // Predicated region
        $region61: #{tpu_custom_call.1} parent=55 // pred_check
          %p378 = pneg %p73
        $region62: #{tpu_custom_call.1} parent=55 // pred_check_branch
          %380 = sbr.rel (%p378) target = $region64
        $region63: #{tpu_custom_call.1} parent=55 // pred_region
          %382 = dma.done [#allocation5], 16
        $region64: #{tpu_custom_call.1} parent=55 // pred_fallthru
          _
        // Predicated region
        $region65: #{tpu_custom_call.1} parent=55 // pred_check
          %p383 = pneg %p94
        $region66: #{tpu_custom_call.1} parent=55 // pred_check_branch
          %385 = sbr.rel (%p383) target = $region68
        $region67: #{tpu_custom_call.1} parent=55 // pred_region
          %387 = dma.done [#allocation6], 16
        $region68: #{tpu_custom_call.1} parent=55 // pred_fallthru
          _
        // Predicated region
        $region69: #{tpu_custom_call.1} parent=55 // pred_check
          %p388 = pneg %p115
        $region70: #{tpu_custom_call.1} parent=55 // pred_check_branch
          %390 = sbr.rel (%p388) target = $region72
        $region71: #{tpu_custom_call.1} parent=55 // pred_region
          %392 = dma.done [#allocation10], 16
        $region72: #{tpu_custom_call.1} parent=55 // pred_fallthru
          _
        // Predicated region
        $region73: #{tpu_custom_call.1} parent=55 // pred_check
          %p393 = pneg %p136
        $region74: #{tpu_custom_call.1} parent=55 // pred_check_branch
          %395 = sbr.rel (%p393) target = $region76
        $region75: #{tpu_custom_call.1} parent=55 // pred_region
          %397 = dma.done [#allocation10], 16
        $region76: #{tpu_custom_call.1} parent=55 // pred_fallthru
          _
        // Predicated region
        $region77: #{tpu_custom_call.1} parent=55 // pred_check
          %p398 = pneg %p157
        $region78: #{tpu_custom_call.1} parent=55 // pred_check_branch
          %400 = sbr.rel (%p398) target = $region80
        $region79: #{tpu_custom_call.1} parent=55 // pred_region
          %402 = dma.done [#allocation13], 16
        $region80: #{tpu_custom_call.1} parent=55 // pred_fallthru
          _
        // Predicated region
        $region81: #{tpu_custom_call.1} parent=55 // pred_check
          %p403 = pneg %p178
        $region82: #{tpu_custom_call.1} parent=55 // pred_check_branch
          %405 = sbr.rel (%p403) target = $region84
        $region83: #{tpu_custom_call.1} parent=55 // pred_region
          %407 = dma.done [#allocation13], 16
        $region84: #{tpu_custom_call.1} parent=55 // pred_fallthru
          _
        // Predicated region
        $region85: #{tpu_custom_call.1} parent=55 // pred_check
          %p408 = pneg %p199
        $region86: #{tpu_custom_call.1} parent=55 // pred_check_branch
          %410 = sbr.rel (%p408) target = $region88
        $region87: #{tpu_custom_call.1} parent=55 // pred_region
          %412 = dma.done [#allocation16], 2048
        $region88: #{tpu_custom_call.1} parent=55 // pred_fallthru
          _
        %413 = sfence
        %s414 = sand.u32 %s39, 1
        %s415 = scalar_lea.sflag [#allocation3], %s414
        %s416 = sand.u32 %s39, 1
        %s417 = smul.addr %s416, 8
        %s418 = scalar_lea.vmem [#allocation2], %s417
        %p419 = pneg %p52
        %p420 = pneg %p49
        %p421 = pneg %p73
        %p422 = pneg %p70
        %p423 = pneg %p94
        %p424 = pneg %p91
        %p425 = pneg %p115
        %p426 = pneg %p112
        %p427 = pneg %p136
        %p428 = pneg %p133
        %p429 = pneg %p157
        %p430 = pneg %p154
        %p431 = pneg %p178
        %p432 = pneg %p175
        %p433 = pneg %p199
        %p434 = pneg %p196
        %p435 = pneg %p220
        %p436 = pneg %p217
        %p437 = pneg %p246
        %p438 = pneg %p243
        %s439 = sand.u32 %s233, 1
        %s440 = scalar_lea.sflag [#allocation4], %s439
        %s441 = sand.u32 %s233, 1
        %s442 = smul.addr %s441, 8
        %s443 = scalar_lea.vmem [#allocation17], %s442
        %v444 = vld [vmem:[%s372] sm:$0xff]
        %s445 = sld [smem:[#allocation7]]
        %v446 = vstv %s445
        %v447 = vmul.f32 %v444, %v446
        %s448 = sld [smem:[#allocation7 + $0x1]]
        %v449 = vstv %s448
        %v450 = vmul.f32 %v444, %v449
        %452 = vrot.lane.b32.xlu0 %v450, 127
        %v453 = vpop.permute.xlu0 %452
        %v455 = vadd.f32 %v447, %v453
        %s456 = sld [smem:[#allocation7 + $0x2]]
        %v457 = vstv %s456
        %v458 = vmul.f32 %v444, %v457
        %460 = vrot.lane.b32.xlu0 %v458, 126
        %v461 = vpop.permute.xlu0 %460
        %v463 = vadd.f32 %v455, %v461
        %vm464 = vcmask 244736
        %v465 = vsel %vm464, %v463, -inf
        %466 = vmax.xlane.f32.xlu0 %v465
        %v467 = vpop.xlane.xlu0 %466
        %s468 = sld [smem:[#allocation8]]
        %v469 = vstv %s468
        %v470 = vadd.f32 %v467, %v469
        %v471 = vmax.f32 %v470, 0.0
        %s472 = sld [smem:[#allocation7 + $0x3]]
        %v473 = vstv %s472
        %v474 = vmul.f32 %v444, %v473
        %s475 = sld [smem:[#allocation7 + $0x4]]
        %v476 = vstv %s475
        %v477 = vmul.f32 %v444, %v476
        %479 = vrot.lane.b32.xlu0 %v477, 127
        %v480 = vpop.permute.xlu0 %479
        %v482 = vadd.f32 %v474, %v480
        %s483 = sld [smem:[#allocation7 + $0x5]]
        %v484 = vstv %s483
        %v485 = vmul.f32 %v444, %v484
        %487 = vrot.lane.b32.xlu0 %v485, 126
        %v488 = vpop.permute.xlu0 %487
        %v490 = vadd.f32 %v482, %v488
        %v491 = vsel %vm464, %v490, -inf
        %492 = vmax.xlane.f32.xlu0 %v491
        %v493 = vpop.xlane.xlu0 %492
        %s494 = sld [smem:[#allocation8 + $0x1]]
        %v495 = vstv %s494
        %v496 = vadd.f32 %v493, %v495
        %v497 = vmax.f32 %v496, 0.0
        %s498 = sld [smem:[#allocation7 + $0x6]]
        %v499 = vstv %s498
        %v500 = vmul.f32 %v444, %v499
        %s501 = sld [smem:[#allocation7 + $0x7]]
        %v502 = vstv %s501
        %v503 = vmul.f32 %v444, %v502
        %505 = vrot.lane.b32.xlu0 %v503, 127
        %v506 = vpop.permute.xlu0 %505
        %v508 = vadd.f32 %v500, %v506
        %s509 = sld [smem:[#allocation7 + $0x8]]
        %v510 = vstv %s509
        %v511 = vmul.f32 %v444, %v510
        %513 = vrot.lane.b32.xlu0 %v511, 126
        %v514 = vpop.permute.xlu0 %513
        %v516 = vadd.f32 %v508, %v514
        %v517 = vsel %vm464, %v516, -inf
        %518 = vmax.xlane.f32.xlu0 %v517
        %v519 = vpop.xlane.xlu0 %518
        %s520 = sld [smem:[#allocation8 + $0x2]]
        %v521 = vstv %s520
        %v522 = vadd.f32 %v519, %v521
        %v523 = vmax.f32 %v522, 0.0
        %s524 = sld [smem:[#allocation7 + $0x9]]
        %v525 = vstv %s524
        %v526 = vmul.f32 %v444, %v525
        %s527 = sld [smem:[#allocation7 + $0xa]]
        %v528 = vstv %s527
        %v529 = vmul.f32 %v444, %v528
        %531 = vrot.lane.b32.xlu0 %v529, 127
        %v532 = vpop.permute.xlu0 %531
        %v534 = vadd.f32 %v526, %v532
        %s535 = sld [smem:[#allocation7 + $0xb]]
        %v536 = vstv %s535
        %v537 = vmul.f32 %v444, %v536
        %539 = vrot.lane.b32.xlu0 %v537, 126
        %v540 = vpop.permute.xlu0 %539
        %v542 = vadd.f32 %v534, %v540
        %v543 = vsel %vm464, %v542, -inf
        %544 = vmax.xlane.f32.xlu0 %v543
        %v545 = vpop.xlane.xlu0 %544
        %s546 = sld [smem:[#allocation8 + $0x3]]
        %v547 = vstv %s546
        %v548 = vadd.f32 %v545, %v547
        %v549 = vmax.f32 %v548, 0.0
        %s550 = sld [smem:[#allocation7 + $0xc]]
        %v551 = vstv %s550
        %v552 = vmul.f32 %v444, %v551
        %s553 = sld [smem:[#allocation7 + $0xd]]
        %v554 = vstv %s553
        %v555 = vmul.f32 %v444, %v554
        %557 = vrot.lane.b32.xlu0 %v555, 127
        %v558 = vpop.permute.xlu0 %557
        %v560 = vadd.f32 %v552, %v558
        %s561 = sld [smem:[#allocation7 + $0xe]]
        %v562 = vstv %s561
        %v563 = vmul.f32 %v444, %v562
        %565 = vrot.lane.b32.xlu0 %v563, 126
        %v566 = vpop.permute.xlu0 %565
        %v568 = vadd.f32 %v560, %v566
        %v569 = vsel %vm464, %v568, -inf
        %570 = vmax.xlane.f32.xlu0 %v569
        %v571 = vpop.xlane.xlu0 %570
        %s572 = sld [smem:[#allocation8 + $0x4]]
        %v573 = vstv %s572
        %v574 = vadd.f32 %v571, %v573
        %v575 = vmax.f32 %v574, 0.0
        %s576 = sld [smem:[#allocation7 + $0xf]]
        %v577 = vstv %s576
        %v578 = vmul.f32 %v444, %v577
        %s579 = sld [smem:[#allocation7 + $0x10]]
        %v580 = vstv %s579
        %v581 = vmul.f32 %v444, %v580
        %583 = vrot.lane.b32.xlu0 %v581, 127
        %v584 = vpop.permute.xlu0 %583
        %v586 = vadd.f32 %v578, %v584
        %s587 = sld [smem:[#allocation7 + $0x11]]
        %v588 = vstv %s587
        %v589 = vmul.f32 %v444, %v588
        %591 = vrot.lane.b32.xlu0 %v589, 126
        %v592 = vpop.permute.xlu0 %591
        %v594 = vadd.f32 %v586, %v592
        %v595 = vsel %vm464, %v594, -inf
        %596 = vmax.xlane.f32.xlu0 %v595
        %v597 = vpop.xlane.xlu0 %596
        %s598 = sld [smem:[#allocation8 + $0x5]]
        %v599 = vstv %s598
        %v600 = vadd.f32 %v597, %v599
        %v601 = vmax.f32 %v600, 0.0
        %s602 = sld [smem:[#allocation7 + $0x12]]
        %v603 = vstv %s602
        %v604 = vmul.f32 %v444, %v603
        %s605 = sld [smem:[#allocation7 + $0x13]]
        %v606 = vstv %s605
        %v607 = vmul.f32 %v444, %v606
        %609 = vrot.lane.b32.xlu0 %v607, 127
        %v610 = vpop.permute.xlu0 %609
        %v612 = vadd.f32 %v604, %v610
        %s613 = sld [smem:[#allocation7 + $0x14]]
        %v614 = vstv %s613
        %v615 = vmul.f32 %v444, %v614
        %617 = vrot.lane.b32.xlu0 %v615, 126
        %v618 = vpop.permute.xlu0 %617
        %v620 = vadd.f32 %v612, %v618
        %v621 = vsel %vm464, %v620, -inf
        %622 = vmax.xlane.f32.xlu0 %v621
        %v623 = vpop.xlane.xlu0 %622
        %s624 = sld [smem:[#allocation8 + $0x6]]
        %v625 = vstv %s624
        %v626 = vadd.f32 %v623, %v625
        %v627 = vmax.f32 %v626, 0.0
        %s628 = sld [smem:[#allocation7 + $0x15]]
        %v629 = vstv %s628
        %v630 = vmul.f32 %v444, %v629
        %s631 = sld [smem:[#allocation7 + $0x16]]
        %v632 = vstv %s631
        %v633 = vmul.f32 %v444, %v632
        %635 = vrot.lane.b32.xlu0 %v633, 127
        %v636 = vpop.permute.xlu0 %635
        %v638 = vadd.f32 %v630, %v636
        %s639 = sld [smem:[#allocation7 + $0x17]]
        %v640 = vstv %s639
        %v641 = vmul.f32 %v444, %v640
        %643 = vrot.lane.b32.xlu0 %v641, 126
        %v644 = vpop.permute.xlu0 %643
        %v646 = vadd.f32 %v638, %v644
        %v647 = vsel %vm464, %v646, -inf
        %648 = vmax.xlane.f32.xlu0 %v647
        %v649 = vpop.xlane.xlu0 %648
        %s650 = sld [smem:[#allocation8 + $0x7]]
        %v651 = vstv %s650
        %v652 = vadd.f32 %v649, %v651
        %v653 = vmax.f32 %v652, 0.0
        %s654 = sld [smem:[#allocation9]]
        %v655 = vstv %s654
        %v656 = vmul.f32 %v444, %v655
        %s657 = sld [smem:[#allocation9 + $0x1]]
        %v658 = vstv %s657
        %v659 = vmul.f32 %v444, %v658
        %661 = vrot.lane.b32.xlu0 %v659, 127
        %v662 = vpop.permute.xlu0 %661
        %v664 = vadd.f32 %v656, %v662
        %s665 = sld [smem:[#allocation9 + $0x2]]
        %v666 = vstv %s665
        %v667 = vmul.f32 %v444, %v666
        %669 = vrot.lane.b32.xlu0 %v667, 126
        %v670 = vpop.permute.xlu0 %669
        %v672 = vadd.f32 %v664, %v670
        %s673 = sld [smem:[#allocation9 + $0x3]]
        %v674 = vstv %s673
        %v675 = vmul.f32 %v444, %v674
        %677 = vrot.lane.b32.xlu0 %v675, 125
        %v678 = vpop.permute.xlu0 %677
        %v680 = vadd.f32 %v672, %v678
        %vm681 = vcmask 236544
        %v682 = vsel %vm681, %v680, -inf
        %683 = vmax.xlane.f32.xlu0 %v682
        %v684 = vpop.xlane.xlu0 %683
        %s685 = sld [smem:[#allocation11]]
        %v686 = vstv %s685
        %v687 = vadd.f32 %v684, %v686
        %v688 = vmax.f32 %v687, 0.0
        %s689 = sld [smem:[#allocation9 + $0x4]]
        %v690 = vstv %s689
        %v691 = vmul.f32 %v444, %v690
        %s692 = sld [smem:[#allocation9 + $0x5]]
        %v693 = vstv %s692
        %v694 = vmul.f32 %v444, %v693
        %696 = vrot.lane.b32.xlu0 %v694, 127
        %v697 = vpop.permute.xlu0 %696
        %v699 = vadd.f32 %v691, %v697
        %s700 = sld [smem:[#allocation9 + $0x6]]
        %v701 = vstv %s700
        %v702 = vmul.f32 %v444, %v701
        %704 = vrot.lane.b32.xlu0 %v702, 126
        %v705 = vpop.permute.xlu0 %704
        %v707 = vadd.f32 %v699, %v705
        %s708 = sld [smem:[#allocation9 + $0x7]]
        %v709 = vstv %s708
        %v710 = vmul.f32 %v444, %v709
        %712 = vrot.lane.b32.xlu0 %v710, 125
        %v713 = vpop.permute.xlu0 %712
        %v715 = vadd.f32 %v707, %v713
        %v716 = vsel %vm681, %v715, -inf
        %717 = vmax.xlane.f32.xlu0 %v716
        %v718 = vpop.xlane.xlu0 %717
        %s719 = sld [smem:[#allocation11 + $0x1]]
        %v720 = vstv %s719
        %v721 = vadd.f32 %v718, %v720
        %v722 = vmax.f32 %v721, 0.0
        %s723 = sld [smem:[#allocation9 + $0x8]]
        %v724 = vstv %s723
        %v725 = vmul.f32 %v444, %v724
        %s726 = sld [smem:[#allocation9 + $0x9]]
        %v727 = vstv %s726
        %v728 = vmul.f32 %v444, %v727
        %730 = vrot.lane.b32.xlu0 %v728, 127
        %v731 = vpop.permute.xlu0 %730
        %v733 = vadd.f32 %v725, %v731
        %s734 = sld [smem:[#allocation9 + $0xa]]
        %v735 = vstv %s734
        %v736 = vmul.f32 %v444, %v735
        %738 = vrot.lane.b32.xlu0 %v736, 126
        %v739 = vpop.permute.xlu0 %738
        %v741 = vadd.f32 %v733, %v739
        %s742 = sld [smem:[#allocation9 + $0xb]]
        %v743 = vstv %s742
        %v744 = vmul.f32 %v444, %v743
        %746 = vrot.lane.b32.xlu0 %v744, 125
        %v747 = vpop.permute.xlu0 %746
        %v749 = vadd.f32 %v741, %v747
        %v750 = vsel %vm681, %v749, -inf
        %751 = vmax.xlane.f32.xlu0 %v750
        %v752 = vpop.xlane.xlu0 %751
        %s753 = sld [smem:[#allocation11 + $0x2]]
        %v754 = vstv %s753
        %v755 = vadd.f32 %v752, %v754
        %v756 = vmax.f32 %v755, 0.0
        %s757 = sld [smem:[#allocation9 + $0xc]]
        %v758 = vstv %s757
        %v759 = vmul.f32 %v444, %v758
        %s760 = sld [smem:[#allocation9 + $0xd]]
        %v761 = vstv %s760
        %v762 = vmul.f32 %v444, %v761
        %764 = vrot.lane.b32.xlu0 %v762, 127
        %v765 = vpop.permute.xlu0 %764
        %v767 = vadd.f32 %v759, %v765
        %s768 = sld [smem:[#allocation9 + $0xe]]
        %v769 = vstv %s768
        %v770 = vmul.f32 %v444, %v769
        %772 = vrot.lane.b32.xlu0 %v770, 126
        %v773 = vpop.permute.xlu0 %772
        %v775 = vadd.f32 %v767, %v773
        %s776 = sld [smem:[#allocation9 + $0xf]]
        %v777 = vstv %s776
        %v778 = vmul.f32 %v444, %v777
        %780 = vrot.lane.b32.xlu0 %v778, 125
        %v781 = vpop.permute.xlu0 %780
        %v783 = vadd.f32 %v775, %v781
        %v784 = vsel %vm681, %v783, -inf
        %785 = vmax.xlane.f32.xlu0 %v784
        %v786 = vpop.xlane.xlu0 %785
        %s787 = sld [smem:[#allocation11 + $0x3]]
        %v788 = vstv %s787
        %v789 = vadd.f32 %v786, %v788
        %v790 = vmax.f32 %v789, 0.0
        %s791 = sld [smem:[#allocation9 + $0x10]]
        %v792 = vstv %s791
        %v793 = vmul.f32 %v444, %v792
        %s794 = sld [smem:[#allocation9 + $0x11]]
        %v795 = vstv %s794
        %v796 = vmul.f32 %v444, %v795
        %798 = vrot.lane.b32.xlu0 %v796, 127
        %v799 = vpop.permute.xlu0 %798
        %v801 = vadd.f32 %v793, %v799
        %s802 = sld [smem:[#allocation9 + $0x12]]
        %v803 = vstv %s802
        %v804 = vmul.f32 %v444, %v803
        %806 = vrot.lane.b32.xlu0 %v804, 126
        %v807 = vpop.permute.xlu0 %806
        %v809 = vadd.f32 %v801, %v807
        %s810 = sld [smem:[#allocation9 + $0x13]]
        %v811 = vstv %s810
        %v812 = vmul.f32 %v444, %v811
        %814 = vrot.lane.b32.xlu0 %v812, 125
        %v815 = vpop.permute.xlu0 %814
        %v817 = vadd.f32 %v809, %v815
        %v818 = vsel %vm681, %v817, -inf
        %819 = vmax.xlane.f32.xlu0 %v818
        %v820 = vpop.xlane.xlu0 %819
        %s821 = sld [smem:[#allocation11 + $0x4]]
        %v822 = vstv %s821
        %v823 = vadd.f32 %v820, %v822
        %v824 = vmax.f32 %v823, 0.0
        %s825 = sld [smem:[#allocation9 + $0x14]]
        %v826 = vstv %s825
        %v827 = vmul.f32 %v444, %v826
        %s828 = sld [smem:[#allocation9 + $0x15]]
        %v829 = vstv %s828
        %v830 = vmul.f32 %v444, %v829
        %832 = vrot.lane.b32.xlu0 %v830, 127
        %v833 = vpop.permute.xlu0 %832
        %v835 = vadd.f32 %v827, %v833
        %s836 = sld [smem:[#allocation9 + $0x16]]
        %v837 = vstv %s836
        %v838 = vmul.f32 %v444, %v837
        %840 = vrot.lane.b32.xlu0 %v838, 126
        %v841 = vpop.permute.xlu0 %840
        %v843 = vadd.f32 %v835, %v841
        %s844 = sld [smem:[#allocation9 + $0x17]]
        %v845 = vstv %s844
        %v846 = vmul.f32 %v444, %v845
        %848 = vrot.lane.b32.xlu0 %v846, 125
        %v849 = vpop.permute.xlu0 %848
        %v851 = vadd.f32 %v843, %v849
        %v852 = vsel %vm681, %v851, -inf
        %853 = vmax.xlane.f32.xlu0 %v852
        %v854 = vpop.xlane.xlu0 %853
        %s855 = sld [smem:[#allocation11 + $0x5]]
        %v856 = vstv %s855
        %v857 = vadd.f32 %v854, %v856
        %v858 = vmax.f32 %v857, 0.0
        %s859 = sld [smem:[#allocation9 + $0x18]]
        %v860 = vstv %s859
        %v861 = vmul.f32 %v444, %v860
        %s862 = sld [smem:[#allocation9 + $0x19]]
        %v863 = vstv %s862
        %v864 = vmul.f32 %v444, %v863
        %866 = vrot.lane.b32.xlu0 %v864, 127
        %v867 = vpop.permute.xlu0 %866
        %v869 = vadd.f32 %v861, %v867
        %s870 = sld [smem:[#allocation9 + $0x1a]]
        %v871 = vstv %s870
        %v872 = vmul.f32 %v444, %v871
        %874 = vrot.lane.b32.xlu0 %v872, 126
        %v875 = vpop.permute.xlu0 %874
        %v877 = vadd.f32 %v869, %v875
        %s878 = sld [smem:[#allocation9 + $0x1b]]
        %v879 = vstv %s878
        %v880 = vmul.f32 %v444, %v879
        %882 = vrot.lane.b32.xlu0 %v880, 125
        %v883 = vpop.permute.xlu0 %882
        %v885 = vadd.f32 %v877, %v883
        %v886 = vsel %vm681, %v885, -inf
        %887 = vmax.xlane.f32.xlu0 %v886
        %v888 = vpop.xlane.xlu0 %887
        %s889 = sld [smem:[#allocation11 + $0x6]]
        %v890 = vstv %s889
        %v891 = vadd.f32 %v888, %v890
        %v892 = vmax.f32 %v891, 0.0
        %s893 = sld [smem:[#allocation9 + $0x1c]]
        %v894 = vstv %s893
        %v895 = vmul.f32 %v444, %v894
        %s896 = sld [smem:[#allocation9 + $0x1d]]
        %v897 = vstv %s896
        %v898 = vmul.f32 %v444, %v897
        %900 = vrot.lane.b32.xlu0 %v898, 127
        %v901 = vpop.permute.xlu0 %900
        %v903 = vadd.f32 %v895, %v901
        %s904 = sld [smem:[#allocation9 + $0x1e]]
        %v905 = vstv %s904
        %v906 = vmul.f32 %v444, %v905
        %908 = vrot.lane.b32.xlu0 %v906, 126
        %v909 = vpop.permute.xlu0 %908
        %v911 = vadd.f32 %v903, %v909
        %s912 = sld [smem:[#allocation9 + $0x1f]]
        %v913 = vstv %s912
        %v914 = vmul.f32 %v444, %v913
        %916 = vrot.lane.b32.xlu0 %v914, 125
        %v917 = vpop.permute.xlu0 %916
        %v919 = vadd.f32 %v911, %v917
        %v920 = vsel %vm681, %v919, -inf
        %921 = vmax.xlane.f32.xlu0 %v920
        %v922 = vpop.xlane.xlu0 %921
        %s923 = sld [smem:[#allocation11 + $0x7]]
        %v924 = vstv %s923
        %v925 = vadd.f32 %v922, %v924
        %v926 = vmax.f32 %v925, 0.0
        %s927 = sld [smem:[#allocation12]]
        %v928 = vstv %s927
        %v929 = vmul.f32 %v444, %v928
        %s930 = sld [smem:[#allocation12 + $0x1]]
        %v931 = vstv %s930
        %v932 = vmul.f32 %v444, %v931
        %934 = vrot.lane.b32.xlu0 %v932, 127
        %v935 = vpop.permute.xlu0 %934
        %v937 = vadd.f32 %v929, %v935
        %s938 = sld [smem:[#allocation12 + $0x2]]
        %v939 = vstv %s938
        %v940 = vmul.f32 %v444, %v939
        %942 = vrot.lane.b32.xlu0 %v940, 126
        %v943 = vpop.permute.xlu0 %942
        %v945 = vadd.f32 %v937, %v943
        %s946 = sld [smem:[#allocation12 + $0x3]]
        %v947 = vstv %s946
        %v948 = vmul.f32 %v444, %v947
        %950 = vrot.lane.b32.xlu0 %v948, 125
        %v951 = vpop.permute.xlu0 %950
        %v953 = vadd.f32 %v945, %v951
        %s954 = sld [smem:[#allocation12 + $0x4]]
        %v955 = vstv %s954
        %v956 = vmul.f32 %v444, %v955
        %958 = vrot.lane.b32.xlu0 %v956, 124
        %v959 = vpop.permute.xlu0 %958
        %v961 = vadd.f32 %v953, %v959
        %vm962 = vcmask 228352
        %v963 = vsel %vm962, %v961, -inf
        %964 = vmax.xlane.f32.xlu0 %v963
        %v965 = vpop.xlane.xlu0 %964
        %s966 = sld [smem:[#allocation14]]
        %v967 = vstv %s966
        %v968 = vadd.f32 %v965, %v967
        %v969 = vmax.f32 %v968, 0.0
        %s970 = sld [smem:[#allocation12 + $0x5]]
        %v971 = vstv %s970
        %v972 = vmul.f32 %v444, %v971
        %s973 = sld [smem:[#allocation12 + $0x6]]
        %v974 = vstv %s973
        %v975 = vmul.f32 %v444, %v974
        %977 = vrot.lane.b32.xlu0 %v975, 127
        %v978 = vpop.permute.xlu0 %977
        %v980 = vadd.f32 %v972, %v978
        %s981 = sld [smem:[#allocation12 + $0x7]]
        %v982 = vstv %s981
        %v983 = vmul.f32 %v444, %v982
        %985 = vrot.lane.b32.xlu0 %v983, 126
        %v986 = vpop.permute.xlu0 %985
        %v988 = vadd.f32 %v980, %v986
        %s989 = sld [smem:[#allocation12 + $0x8]]
        %v990 = vstv %s989
        %v991 = vmul.f32 %v444, %v990
        %993 = vrot.lane.b32.xlu0 %v991, 125
        %v994 = vpop.permute.xlu0 %993
        %v996 = vadd.f32 %v988, %v994
        %s997 = sld [smem:[#allocation12 + $0x9]]
        %v998 = vstv %s997
        %v999 = vmul.f32 %v444, %v998
        %1001 = vrot.lane.b32.xlu0 %v999, 124
        %v1002 = vpop.permute.xlu0 %1001
        %v1004 = vadd.f32 %v996, %v1002
        %v1005 = vsel %vm962, %v1004, -inf
        %1006 = vmax.xlane.f32.xlu0 %v1005
        %v1007 = vpop.xlane.xlu0 %1006
        %s1008 = sld [smem:[#allocation14 + $0x1]]
        %v1009 = vstv %s1008
        %v1010 = vadd.f32 %v1007, %v1009
        %v1011 = vmax.f32 %v1010, 0.0
        %s1012 = sld [smem:[#allocation12 + $0xa]]
        %v1013 = vstv %s1012
        %v1014 = vmul.f32 %v444, %v1013
        %s1015 = sld [smem:[#allocation12 + $0xb]]
        %v1016 = vstv %s1015
        %v1017 = vmul.f32 %v444, %v1016
        %1019 = vrot.lane.b32.xlu0 %v1017, 127
        %v1020 = vpop.permute.xlu0 %1019
        %v1022 = vadd.f32 %v1014, %v1020
        %s1023 = sld [smem:[#allocation12 + $0xc]]
        %v1024 = vstv %s1023
        %v1025 = vmul.f32 %v444, %v1024
        %1027 = vrot.lane.b32.xlu0 %v1025, 126
        %v1028 = vpop.permute.xlu0 %1027
        %v1030 = vadd.f32 %v1022, %v1028
        %s1031 = sld [smem:[#allocation12 + $0xd]]
        %v1032 = vstv %s1031
        %v1033 = vmul.f32 %v444, %v1032
        %1035 = vrot.lane.b32.xlu0 %v1033, 125
        %v1036 = vpop.permute.xlu0 %1035
        %v1038 = vadd.f32 %v1030, %v1036
        %s1039 = sld [smem:[#allocation12 + $0xe]]
        %v1040 = vstv %s1039
        %v1041 = vmul.f32 %v444, %v1040
        %1043 = vrot.lane.b32.xlu0 %v1041, 124
        %v1044 = vpop.permute.xlu0 %1043
        %v1046 = vadd.f32 %v1038, %v1044
        %v1047 = vsel %vm962, %v1046, -inf
        %1048 = vmax.xlane.f32.xlu0 %v1047
        %v1049 = vpop.xlane.xlu0 %1048
        %s1050 = sld [smem:[#allocation14 + $0x2]]
        %v1051 = vstv %s1050
        %v1052 = vadd.f32 %v1049, %v1051
        %v1053 = vmax.f32 %v1052, 0.0
        %s1054 = sld [smem:[#allocation12 + $0xf]]
        %v1055 = vstv %s1054
        %v1056 = vmul.f32 %v444, %v1055
        %s1057 = sld [smem:[#allocation12 + $0x10]]
        %v1058 = vstv %s1057
        %v1059 = vmul.f32 %v444, %v1058
        %1061 = vrot.lane.b32.xlu0 %v1059, 127
        %v1062 = vpop.permute.xlu0 %1061
        %v1064 = vadd.f32 %v1056, %v1062
        %s1065 = sld [smem:[#allocation12 + $0x11]]
        %v1066 = vstv %s1065
        %v1067 = vmul.f32 %v444, %v1066
        %1069 = vrot.lane.b32.xlu0 %v1067, 126
        %v1070 = vpop.permute.xlu0 %1069
        %v1072 = vadd.f32 %v1064, %v1070
        %s1073 = sld [smem:[#allocation12 + $0x12]]
        %v1074 = vstv %s1073
        %v1075 = vmul.f32 %v444, %v1074
        %1077 = vrot.lane.b32.xlu0 %v1075, 125
        %v1078 = vpop.permute.xlu0 %1077
        %v1080 = vadd.f32 %v1072, %v1078
        %s1081 = sld [smem:[#allocation12 + $0x13]]
        %v1082 = vstv %s1081
        %v1083 = vmul.f32 %v444, %v1082
        %1085 = vrot.lane.b32.xlu0 %v1083, 124
        %v1086 = vpop.permute.xlu0 %1085
        %v1088 = vadd.f32 %v1080, %v1086
        %v1089 = vsel %vm962, %v1088, -inf
        %1090 = vmax.xlane.f32.xlu0 %v1089
        %v1091 = vpop.xlane.xlu0 %1090
        %s1092 = sld [smem:[#allocation14 + $0x3]]
        %v1093 = vstv %s1092
        %v1094 = vadd.f32 %v1091, %v1093
        %v1095 = vmax.f32 %v1094, 0.0
        %s1096 = sld [smem:[#allocation12 + $0x14]]
        %v1097 = vstv %s1096
        %v1098 = vmul.f32 %v444, %v1097
        %s1099 = sld [smem:[#allocation12 + $0x15]]
        %v1100 = vstv %s1099
        %v1101 = vmul.f32 %v444, %v1100
        %1103 = vrot.lane.b32.xlu0 %v1101, 127
        %v1104 = vpop.permute.xlu0 %1103
        %v1106 = vadd.f32 %v1098, %v1104
        %s1107 = sld [smem:[#allocation12 + $0x16]]
        %v1108 = vstv %s1107
        %v1109 = vmul.f32 %v444, %v1108
        %1111 = vrot.lane.b32.xlu0 %v1109, 126
        %v1112 = vpop.permute.xlu0 %1111
        %v1114 = vadd.f32 %v1106, %v1112
        %s1115 = sld [smem:[#allocation12 + $0x17]]
        %v1116 = vstv %s1115
        %v1117 = vmul.f32 %v444, %v1116
        %1119 = vrot.lane.b32.xlu0 %v1117, 125
        %v1120 = vpop.permute.xlu0 %1119
        %v1122 = vadd.f32 %v1114, %v1120
        %s1123 = sld [smem:[#allocation12 + $0x18]]
        %v1124 = vstv %s1123
        %v1125 = vmul.f32 %v444, %v1124
        %1127 = vrot.lane.b32.xlu0 %v1125, 124
        %v1128 = vpop.permute.xlu0 %1127
        %v1130 = vadd.f32 %v1122, %v1128
        %v1131 = vsel %vm962, %v1130, -inf
        %1132 = vmax.xlane.f32.xlu0 %v1131
        %v1133 = vpop.xlane.xlu0 %1132
        %s1134 = sld [smem:[#allocation14 + $0x4]]
        %v1135 = vstv %s1134
        %v1136 = vadd.f32 %v1133, %v1135
        %v1137 = vmax.f32 %v1136, 0.0
        %s1138 = sld [smem:[#allocation12 + $0x19]]
        %v1139 = vstv %s1138
        %v1140 = vmul.f32 %v444, %v1139
        %s1141 = sld [smem:[#allocation12 + $0x1a]]
        %v1142 = vstv %s1141
        %v1143 = vmul.f32 %v444, %v1142
        %1145 = vrot.lane.b32.xlu0 %v1143, 127
        %v1146 = vpop.permute.xlu0 %1145
        %v1148 = vadd.f32 %v1140, %v1146
        %s1149 = sld [smem:[#allocation12 + $0x1b]]
        %v1150 = vstv %s1149
        %v1151 = vmul.f32 %v444, %v1150
        %1153 = vrot.lane.b32.xlu0 %v1151, 126
        %v1154 = vpop.permute.xlu0 %1153
        %v1156 = vadd.f32 %v1148, %v1154
        %s1157 = sld [smem:[#allocation12 + $0x1c]]
        %v1158 = vstv %s1157
        %v1159 = vmul.f32 %v444, %v1158
        %1161 = vrot.lane.b32.xlu0 %v1159, 125
        %v1162 = vpop.permute.xlu0 %1161
        %v1164 = vadd.f32 %v1156, %v1162
        %s1165 = sld [smem:[#allocation12 + $0x1d]]
        %v1166 = vstv %s1165
        %v1167 = vmul.f32 %v444, %v1166
        %1169 = vrot.lane.b32.xlu0 %v1167, 124
        %v1170 = vpop.permute.xlu0 %1169
        %v1172 = vadd.f32 %v1164, %v1170
        %v1173 = vsel %vm962, %v1172, -inf
        %1174 = vmax.xlane.f32.xlu0 %v1173
        %v1175 = vpop.xlane.xlu0 %1174
        %s1176 = sld [smem:[#allocation14 + $0x5]]
        %v1177 = vstv %s1176
        %v1178 = vadd.f32 %v1175, %v1177
        %v1179 = vmax.f32 %v1178, 0.0
        %s1180 = sld [smem:[#allocation12 + $0x1e]]
        %v1181 = vstv %s1180
        %v1182 = vmul.f32 %v444, %v1181
        %s1183 = sld [smem:[#allocation12 + $0x1f]]
        %v1184 = vstv %s1183
        %v1185 = vmul.f32 %v444, %v1184
        %1187 = vrot.lane.b32.xlu0 %v1185, 127
        %v1188 = vpop.permute.xlu0 %1187
        %v1190 = vadd.f32 %v1182, %v1188
        %s1191 = sld [smem:[#allocation12 + $0x20]]
        %v1192 = vstv %s1191
        %v1193 = vmul.f32 %v444, %v1192
        %1195 = vrot.lane.b32.xlu0 %v1193, 126
        %v1196 = vpop.permute.xlu0 %1195
        %v1198 = vadd.f32 %v1190, %v1196
        %s1199 = sld [smem:[#allocation12 + $0x21]]
        %v1200 = vstv %s1199
        %v1201 = vmul.f32 %v444, %v1200
        %1203 = vrot.lane.b32.xlu0 %v1201, 125
        %v1204 = vpop.permute.xlu0 %1203
        %v1206 = vadd.f32 %v1198, %v1204
        %s1207 = sld [smem:[#allocation12 + $0x22]]
        %v1208 = vstv %s1207
        %v1209 = vmul.f32 %v444, %v1208
        %1211 = vrot.lane.b32.xlu0 %v1209, 124
        %v1212 = vpop.permute.xlu0 %1211
        %v1214 = vadd.f32 %v1206, %v1212
        %v1215 = vsel %vm962, %v1214, -inf
        %1216 = vmax.xlane.f32.xlu0 %v1215
        %v1217 = vpop.xlane.xlu0 %1216
        %s1218 = sld [smem:[#allocation14 + $0x6]]
        %v1219 = vstv %s1218
        %v1220 = vadd.f32 %v1217, %v1219
        %v1221 = vmax.f32 %v1220, 0.0
        %s1222 = sld [smem:[#allocation12 + $0x23]]
        %v1223 = vstv %s1222
        %v1224 = vmul.f32 %v444, %v1223
        %s1225 = sld [smem:[#allocation12 + $0x24]]
        %v1226 = vstv %s1225
        %v1227 = vmul.f32 %v444, %v1226
        %1229 = vrot.lane.b32.xlu0 %v1227, 127
        %v1230 = vpop.permute.xlu0 %1229
        %v1232 = vadd.f32 %v1224, %v1230
        %s1233 = sld [smem:[#allocation12 + $0x25]]
        %v1234 = vstv %s1233
        %v1235 = vmul.f32 %v444, %v1234
        %1237 = vrot.lane.b32.xlu0 %v1235, 126
        %v1238 = vpop.permute.xlu0 %1237
        %v1240 = vadd.f32 %v1232, %v1238
        %s1241 = sld [smem:[#allocation12 + $0x26]]
        %v1242 = vstv %s1241
        %v1243 = vmul.f32 %v444, %v1242
        %1245 = vrot.lane.b32.xlu0 %v1243, 125
        %v1246 = vpop.permute.xlu0 %1245
        %v1248 = vadd.f32 %v1240, %v1246
        %s1249 = sld [smem:[#allocation12 + $0x27]]
        %v1250 = vstv %s1249
        %v1251 = vmul.f32 %v444, %v1250
        %1253 = vrot.lane.b32.xlu0 %v1251, 124
        %v1254 = vpop.permute.xlu0 %1253
        %v1256 = vadd.f32 %v1248, %v1254
        %v1257 = vsel %vm962, %v1256, -inf
        %1258 = vmax.xlane.f32.xlu0 %v1257
        %v1259 = vpop.xlane.xlu0 %1258
        %s1260 = sld [smem:[#allocation14 + $0x7]]
        %v1261 = vstv %s1260
        %v1262 = vadd.f32 %v1259, %v1261
        %v1263 = vmax.f32 %v1262, 0.0
        %vm1264 = vcmask 7168
        %v1265 = vsel %vm1264, %v471, %v497
        %vm1266 = vcmask 15360
        %v1267 = vsel %vm1266, %v1265, %v523
        %vm1268 = vcmask 23552
        %v1269 = vsel %vm1268, %v1267, %v549
        %vm1270 = vcmask 31744
        %v1271 = vsel %vm1270, %v1269, %v575
        %vm1272 = vcmask 39936
        %v1273 = vsel %vm1272, %v1271, %v601
        %vm1274 = vcmask 48128
        %v1275 = vsel %vm1274, %v1273, %v627
        %vm1276 = vcmask 56320
        %v1277 = vsel %vm1276, %v1275, %v653
        %vm1278 = vcmask 64512
        %v1279 = vsel %vm1278, %v1277, %v688
        %vm1280 = vcmask 72704
        %v1281 = vsel %vm1280, %v1279, %v722
        %vm1282 = vcmask 80896
        %v1283 = vsel %vm1282, %v1281, %v756
        %vm1284 = vcmask 89088
        %v1285 = vsel %vm1284, %v1283, %v790
        %vm1286 = vcmask 97280
        %v1287 = vsel %vm1286, %v1285, %v824
        %vm1288 = vcmask 105472
        %v1289 = vsel %vm1288, %v1287, %v858
        %vm1290 = vcmask 113664
        %v1291 = vsel %vm1290, %v1289, %v892
        %vm1292 = vcmask 121856
        %v1293 = vsel %vm1292, %v1291, %v926
        %v1294 = vsel %vm1264, %v969, %v1011
        %v1295 = vsel %vm1266, %v1294, %v1053
        %v1296 = vsel %vm1268, %v1295, %v1095
        %v1297 = vsel %vm1270, %v1296, %v1137
        %v1298 = vsel %vm1272, %v1297, %v1179
        %v1299 = vsel %vm1274, %v1298, %v1221
        %v1300 = vsel %vm1276, %v1299, %v1263
        %v1301 = vsel %vm1278, %v1300, 0.0
        %1303 = vrot.lane.b32.xlu0 %v1301, 16
        %v1304 = vpop.permute.xlu0 %1303
        %vm1306 = vcmask 130048
        %v1307 = vsel %vm1306, %v1293, %v1304
        %v1308 = vld [vmem:[#allocation15] sm:$0xff]
        %v1309 = vld [vmem:[#allocation15 + $0x8] sm:$0xff]
        %v1310 = vld [vmem:[#allocation15 + $0x10] sm:$0xff]
        %v1311 = vld [vmem:[#allocation15 + $0x18] sm:$0xff]
        %v1312 = vld [vmem:[#allocation15 + $0x20] sm:$0xff]
        %v1313 = vld [vmem:[#allocation15 + $0x28] sm:$0xff]
        %v1314 = vld [vmem:[#allocation15 + $0x30] sm:$0xff]
        %v1315 = vld [vmem:[#allocation15 + $0x38] sm:$0xff]
        %v1316 = vld [vmem:[#allocation15 + $0x40] sm:$0xff]
        %v1317 = vld [vmem:[#allocation15 + $0x48] sm:$0xff]
        %v1318 = vld [vmem:[#allocation15 + $0x50] sm:$0xff]
        %v1319 = vld [vmem:[#allocation15 + $0x58] sm:$0xff]
        %v1320 = vld [vmem:[#allocation15 + $0x60] sm:$0xff]
        %v1321 = vld [vmem:[#allocation15 + $0x68] sm:$0xff]
        %v1322 = vld [vmem:[#allocation15 + $0x70] sm:$0xff]
        %v1323 = vld [vmem:[#allocation15 + $0x78] sm:$0xff]
        %v1324 = vld [vmem:[%s8] sm:$0x1]
        %v1326 = vperm.slane %v1324, 0
        %1328 = vmatpush.msra.mxu0 %v1323
        %1329 = vmatpush.msra.mxu0 %v1322
        %1330 = vmatpush.msra.mxu0 %v1321
        %1331 = vmatpush.msra.mxu0 %v1320
        %1332 = vmatpush.msra.mxu0 %v1319
        %1333 = vmatpush.msra.mxu0 %v1318
        %1334 = vmatpush.msra.mxu0 %v1317
        %1335 = vmatpush.msra.mxu0 %v1316
        %1336 = vmatpush.msra.mxu0 %v1315
        %1337 = vmatpush.msra.mxu0 %v1314
        %1338 = vmatpush.msra.mxu0 %v1313
        %1339 = vmatpush.msra.mxu0 %v1312
        %1340 = vmatpush.msra.mxu0 %v1311
        %1341 = vmatpush.msra.mxu0 %v1310
        %1342 = vmatpush.msra.mxu0 %v1309
        %1343 = vmatpush.msra.mxu0 %v1308
        %1344 = vmatmul.f32.gmra.mxu0 %v1307
        %v1345 = vpop.f32.mrf.mxu0
        %v1346 = vadd.f32 %v1326, %v1345
        %1347 = vdwg.mxu0
        %1348 = vst [vmem:[%s443] sm:$0xff] %v1346
        %s1349 = sand.u32 %s233, 1
        %s1350 = scalar_lea.sflag [#allocation4], %s1349
        %s1351 = sand.u32 %s233, 1
        %s1352 = smul.addr %s1351, 8
        %s1353 = scalar_lea.vmem [#allocation17], %s1352
        // Predicated region
        $region89: #{tpu_custom_call.1} parent=55 // pred_check
          %p1354 = pneg %p243
        $region90: #{tpu_custom_call.1} parent=55 // pred_check_branch
          %1356 = sbr.rel (%p1354) target = $region92
        $region91: #{tpu_custom_call.1} parent=55 // pred_region
          %1358 = vsyncadd %s1350, 0
          %s1359 = smul.addr %s31, 8
          %s1360 = scalar_lea.hbm %s9, %s1359
          %s1362 = sshll.u32 %s1353, 4
          %s1363 = int_to_ptr.vmem [resolvable:$true] %s1362
          %s1364 = sshll.u32 %s1360, 4
          %s1365 = int_to_ptr.hbm [resolvable:$true] %s1364
          %1367 = dma.vmem_to_hbm [thread:$0]  %s1363, 128, %s1365, %s1350
        $region92: #{tpu_custom_call.1} parent=55 // pred_fallthru
          _
      $region56: #{tpu_custom_call.1} parent=5 // pred_fallthru
        _
      %p1368 = scmp.le.s32.totalorder 2, %s26
      // Predicated region
      $region93: #{tpu_custom_call.1} parent=5 // pred_check
        %p1369 = pneg %p1368
      $region94: #{tpu_custom_call.1} parent=5 // pred_check_branch
        %1371 = sbr.rel (%p1369) target = $region96
      $region95: #{tpu_custom_call.1} parent=5 // pred_region
        %s1372 = ssub.s32 %s26, 2
        // Predicated region
        $region97: #{tpu_custom_call.1} parent=95 // pred_check
          %p1373 = pneg %p249
        $region98: #{tpu_custom_call.1} parent=95 // pred_check_branch
          %1375 = sbr.rel (%p1373) target = $region100
        $region99: #{tpu_custom_call.1} parent=95 // pred_region
          %s1376 = sand.u32 %s234, 1
          %s1377 = scalar_lea.sflag [#allocation4], %s1376
          %s1378 = sand.u32 %s234, 1
          %s1379 = smul.addr %s1378, 8
          %s1380 = scalar_lea.vmem [#allocation17], %s1379
          %1382 = dma.done %s1377, 128
        $region100: #{tpu_custom_call.1} parent=95 // pred_fallthru
          _
      $region96: #{tpu_custom_call.1} parent=5 // pred_fallthru
        _
    $region6: #{tpu_custom_call.1} parent=1 // loop_footer
      %s30 = sadd.s32 1, %s26
    $region7: #{tpu_custom_call.1} parent=1 // loop_footer_branch
      %25 = sbr.rel target = $region3
    $region8: #{tpu_custom_call.1} parent=1 // loop_exit
      _
    %1383 = vsyncpa [#allocation3], 1
    %s1384 = scalar_lea.sflag [#allocation3], 1
    %1385 = vsyncpa %s1384, 1
    %1386 = vsyncpa [#allocation16], 1
    %1387 = vsyncpa [#allocation4], 1
    %s1388 = scalar_lea.sflag [#allocation4], 1
    %1389 = vsyncpa %s1388, 1
    %1390 = vsyncpa [#allocation5], 1
    %s1391 = scalar_lea.sflag [#allocation5], 1
    %1392 = vsyncpa %s1391, 1
    %1393 = vsyncpa [#allocation6], 1
    %s1394 = scalar_lea.sflag [#allocation6], 1
    %1395 = vsyncpa %s1394, 1
    %1396 = vsyncpa [#allocation10], 1
    %1397 = vsyncpa [#allocation13], 1

</llo_original>
